<compile_context>
chip_gen: v5e
topology: v5e:2x2
jax: 0.10.0
libtpu: 0.0.40
codegen_flags: <defaults>
</compile_context>

<pallas_src>
import functools

import jax
import jax.numpy as jnp
from jax import lax
from jax.experimental import pallas as pl
from jax.experimental.pallas import tpu as pltpu

KSIZE = 7          # depthwise conv kernel size
PAD = 3            # Conv1d padding
HALO = 8           # sublane-aligned halo rows per time tile
LN_EPS = 1e-5      # nn.LayerNorm default eps
_INV_SQRT2 = 0.7071067811865476


# --------------------------------------------------------------------------
# Pass 1: depthwise conv + LayerNorm + pw1 + GELU  (+ GRN partial statistics)
# --------------------------------------------------------------------------
def _pass1_kernel(x_ref, hl_ref, hr_ref, dww_ref, dwb_ref, lnw_ref, lnb_ref,
                  w1_ref, b1_ref, h_ref, ssq_ref):
    # x_ref   : (1, TT, C) f32      current time tile
    # hl_ref  : (1, 1, 8, C) f32    8 rows preceding the tile (zeros at t==0)
    # hr_ref  : (1, 1, 8, C) f32    8 rows following the tile (zeros at last t)
    # dww_ref : (7, C) f32          depthwise weights, tap-major
    # dwb/lnw/lnb : (1, C) f32
    # w1_ref  : (C, H) bf16         pw1 weight (bf16 for the MXU)
    # b1_ref  : (1, H) f32
    # h_ref   : (1, TT, H) bf16     GELU(pw1(LN(conv(x)))) back to HBM
    # ssq_ref : (1, 8, H) f32       this tile's sum_t h^2 (row-replicated)
    xt = x_ref[0]          # (TT, C)
    hl = hl_ref[0, 0]      # (8, C)
    hr = hr_ref[0, 0]      # (8, C)
    tt = xt.shape[0]

    # Sublane-aligned window covering rows [tile_start-8, tile_start+TT+8).
    win = jnp.concatenate([hl, xt, hr], axis=0)            # (TT + 16, C)

    # Depthwise conv1d (kernel 7, zero padding 3): 7 shifted multiply-adds.
    dww = dww_ref[...]                                     # (7, C)
    y = win[HALO - PAD:HALO - PAD + tt, :] * dww[0][None, :]
    for k in range(1, KSIZE):                              # static unroll
        y = y + win[HALO - PAD + k:HALO - PAD + k + tt, :] * dww[k][None, :]
    y = y + dwb_ref[0][None, :]

    # LayerNorm over channels.
    mean = jnp.mean(y, axis=-1, keepdims=True)
    var = jnp.mean((y - mean) ** 2, axis=-1, keepdims=True)
    y = (y - mean) * lax.rsqrt(var + LN_EPS)
    y = y * lnw_ref[0][None, :] + lnb_ref[0][None, :]

    # pw1 on the MXU: bf16 operands, f32 accumulation.
    h = jnp.dot(y.astype(jnp.bfloat16), w1_ref[...],
                preferred_element_type=jnp.float32)
    h = h + b1_ref[0][None, :]

    # Exact (erf-based) GELU, matching F.gelu default.
    h = 0.5 * h * (1.0 + lax.erf(h * jnp.float32(_INV_SQRT2)))

    # GRN statistics: partial sum over this tile's time rows.
    ssq = jnp.sum(h * h, axis=0, keepdims=True)            # (1, H)
    ssq_ref[0] = jnp.broadcast_to(ssq, (8, ssq.shape[-1]))
    h_ref[0] = h.astype(h_ref.dtype)


# --------------------------------------------------------------------------
# Pass 2: GRN apply + pw2 + residual
# --------------------------------------------------------------------------
def _pass2_kernel(h_ref, ssq_ref, x_ref, gg_ref, gb_ref, w2_ref, b2_ref,
                  out_ref):
    # h_ref   : (1, TT, H) bf16
    # ssq_ref : (1, 1, H) f32       sum over ALL time of h^2 (per batch elem)
    # x_ref   : (1, TT, C) f32      residual
    # gg/gb   : (1, H) f32          GRN gamma / bias
    # w2_ref  : (H, C) bf16
    # b2_ref  : (1, C) f32
    # out_ref : (1, TT, C) f32
    # GRN: gx = ||h||_2 over time, nx = gx / mean_H(gx)   (spec has no eps).
    gx = jnp.sqrt(ssq_ref[0])                              # (1, H)
    mean_gx = jnp.mean(gx, axis=-1, keepdims=True)         # (1, 1)
    nx = gx * pl.reciprocal(mean_gx, approx=True)          # EUP divide

    h = h_ref[0].astype(jnp.float32)                       # (TT, H)
    h = gg_ref[0][None, :] * (nx * h) + gb_ref[0][None, :] + h

    # pw2 on the MXU: bf16 operands, f32 accumulation.
    z = jnp.dot(h.astype(jnp.bfloat16), w2_ref[...],
                preferred_element_type=jnp.float32)
    z = z + b2_ref[0][None, :]

    out_ref[0] = (x_ref[0] + z).astype(out_ref.dtype)


def _pick_time_tile(T, target):
    """Largest multiple-of-16 divisor of T that is <= target (else T)."""
    if T % 16 != 0:
        return T               # single tile; block dims equal full dims
    tt = max(16, min(target - target % 16, T))
    while T % tt:
        tt -= 16
    return tt


def convnext_layer_ntc(x_tc, params, *, block_t=256):
    """ConvNeXt (Vocos) layer on channel-last input.  x_tc: (B, T, C) f32."""
    B, T, C = x_tc.shape
    H = params["pw1_w"].shape[1]
    x_tc = x_tc.astype(jnp.float32)

    tt = _pick_time_tile(T, block_t)
    n_tt = T // tt

    # Sublane-aligned conv halos: the 8 rows before / after each time tile
    # (zeros at the sequence boundaries, matching Conv1d zero padding=3).
    zeros8 = jnp.zeros((B, 1, HALO, C), jnp.float32)
    if n_tt > 1:
        x_r = x_tc.reshape(B, n_tt, tt, C)
        halo_l = jnp.concatenate([zeros8, x_r[:, :-1, tt - HALO:, :]], axis=1)
        halo_r = jnp.concatenate([x_r[:, 1:, :HALO, :], zeros8], axis=1)
    else:
        halo_l = zeros8
        halo_r = zeros8

    # bf16 weights: native MXU dtype and half the VMEM/HBM footprint.
    w1_bf = params["pw1_w"].astype(jnp.bfloat16)
    w2_bf = params["pw2_w"].astype(jnp.bfloat16)

    const2d = lambda shape: pl.BlockSpec(shape, lambda b, t: (0, 0))

    # ---- pass 1 ----
    h_bf, ssq_part = pl.pallas_call(
        _pass1_kernel,
        out_shape=(jax.ShapeDtypeStruct((B, T, H), jnp.bfloat16),
                   jax.ShapeDtypeStruct((B, n_tt * 8, H), jnp.float32)),
        grid_spec=pltpu.PrefetchScalarGridSpec(
            num_scalar_prefetch=0,
            grid=(B, n_tt),
            in_specs=[
                pl.BlockSpec((1, tt, C), lambda b, t: (b, t, 0)),
                pl.BlockSpec((1, 1, HALO, C), lambda b, t: (b, t, 0, 0)),
                pl.BlockSpec((1, 1, HALO, C), lambda b, t: (b, t, 0, 0)),
                const2d((KSIZE, C)),   # dw_w
                const2d((1, C)),       # dw_b
                const2d((1, C)),       # ln_w
                const2d((1, C)),       # ln_b
                const2d((C, H)),       # pw1_w (bf16)
                const2d((1, H)),       # pw1_b
            ],
            out_specs=[
                pl.BlockSpec((1, tt, H), lambda b, t: (b, t, 0)),
                pl.BlockSpec((1, 8, H), lambda b, t: (b, t, 0)),
            ],
        ),
        compiler_params=pltpu.CompilerParams(
            dimension_semantics=("parallel", "parallel")),
    )(x_tc, halo_l, halo_r,
      params["dw_w"], params["dw_b"], params["ln_w"], params["ln_b"],
      w1_bf, params["pw1_b"])

    # Finish the GRN reduction (tiny: B x H) outside the kernel.
    ssq_tot = ssq_part.reshape(B, n_tt, 8, H)[:, :, 0, :].sum(axis=1)
    ssq_tot = ssq_tot[:, None, :]                          # (B, 1, H)

    # ---- pass 2 ----
    out_tc = pl.pallas_call(
        _pass2_kernel,
        out_shape=jax.ShapeDtypeStruct((B, T, C), jnp.float32),
        grid_spec=pltpu.PrefetchScalarGridSpec(
            num_scalar_prefetch=0,
            grid=(B, n_tt),
            in_specs=[
                pl.BlockSpec((1, tt, H), lambda b, t: (b, t, 0)),
                pl.BlockSpec((1, 1, H), lambda b, t: (b, 0, 0)),
                pl.BlockSpec((1, tt, C), lambda b, t: (b, t, 0)),
                const2d((1, H)),       # grn_gamma
                const2d((1, H)),       # grn_bias
                const2d((H, C)),       # pw2_w (bf16)
                const2d((1, C)),       # pw2_b
            ],
            out_specs=pl.BlockSpec((1, tt, C), lambda b, t: (b, t, 0)),
        ),
        compiler_params=pltpu.CompilerParams(
            dimension_semantics=("parallel", "parallel")),
    )(h_bf, ssq_tot, x_tc,
      params["grn_gamma"], params["grn_bias"], w2_bf, params["pw2_b"])

    return out_tc


def convnext_layer(x, params, *, block_t=256):
    """Public NCT interface matching the PyTorch module: (B, C, T)->(B, C, T).

    A model that keeps activations channel-last should call
    `convnext_layer_ntc` directly and skip the two relayouts below.
    """
    x_tc = jnp.transpose(x, (0, 2, 1))
    out_tc = convnext_layer_ntc(x_tc, params, block_t=block_t)
    return jnp.transpose(out_tc, (0, 2, 1))


# --------------------------------------------------------------------------
# Pure-JAX f32 reference (mirrors the PyTorch forward) and parameter init
# --------------------------------------------------------------------------
def convnext_layer_ref(x, params):
    B, C, T = x.shape
    x_tc = jnp.transpose(x, (0, 2, 1))
    x_pad = jnp.pad(x_tc, ((0, 0), (PAD, PAD), (0, 0)))
    y = sum(x_pad[:, k:k + T, :] * params["dw_w"][k][None, None, :]
            for k in range(KSIZE)) + params["dw_b"][0]
    mean = jnp.mean(y, axis=-1, keepdims=True)
    var = jnp.mean((y - mean) ** 2, axis=-1, keepdims=True)
    y = (y - mean) / jnp.sqrt(var + LN_EPS)
    y = y * params["ln_w"][0] + params["ln_b"][0]
    h = y @ params["pw1_w"] + params["pw1_b"][0]
    h = 0.5 * h * (1.0 + lax.erf(h * jnp.float32(_INV_SQRT2)))
    gx = jnp.sqrt(jnp.sum(h * h, axis=1, keepdims=True))
    nx = gx / jnp.mean(gx, axis=-1, keepdims=True)
    h = params["grn_gamma"][0] * (nx * h) + params["grn_bias"][0] + h
    z = h @ params["pw2_w"] + params["pw2_b"][0]
    return x + jnp.transpose(z, (0, 2, 1))


def init_params(key, channel, h_channel):
    ks = jax.random.split(key, 6)
    s = 0.1
    return {
        # depthwise conv weight stored tap-major (7, C); PyTorch is (C, 1, 7)
        "dw_w": s * jax.random.normal(ks[0], (KSIZE, channel), jnp.float32),
        "dw_b": s * jax.random.normal(ks[1], (1, channel), jnp.float32),
        "ln_w": jnp.ones((1, channel), jnp.float32),
        "ln_b": jnp.zeros((1, channel), jnp.float32),
        "pw1_w": s * jax.random.normal(ks[2], (channel, h_channel), jnp.float32),
        "pw1_b": s * jax.random.normal(ks[3], (1, h_channel), jnp.float32),
        "grn_gamma": jnp.ones((1, h_channel), jnp.float32),
        "grn_bias": jnp.zeros((1, h_channel), jnp.float32),
        "pw2_w": s * jax.random.normal(ks[4], (h_channel, channel), jnp.float32),
        "pw2_b": s * jax.random.normal(ks[5], (1, channel), jnp.float32),
    }


if __name__ == "__main__":
    B, C, T, H = 2, 128, 64, 256
    key = jax.random.PRNGKey(0)
    kx, kp = jax.random.split(key)
    x = jax.random.normal(kx, (B, C, T), jnp.float32)
    params = init_params(kp, C, H)

    ref = convnext_layer_ref(x, params)

    # Exercise both the multi-tile path (4 time tiles of 16) and the
    # single-tile path (default block_t >= T).
    f_tiled = jax.jit(functools.partial(convnext_layer, block_t=16))
    f_whole = jax.jit(convnext_layer)
    for f in (f_tiled, f_whole):
        out = jax.block_until_ready(f(x, params))
        assert out.shape == (B, C, T)
        err = jnp.abs(out - ref)
        # bf16 MXU operands (with f32 accumulation) vs a pure-f32 reference:
        # slightly looser tolerances than a bit-exact check.
        assert jnp.allclose(out, ref, rtol=2e-2, atol=1e-1), float(err.max())
        assert float(err.mean()) < 2.5e-2, float(err.mean())

    print("KERNEL_OK")
</pallas_src>

<mosaic_0001>
module attributes {stable_mosaic.version = 11 : i64} {
  func.func @_pass2_kernel(%arg0: i32, %arg1: i32, %arg2: memref<1x16x256xbf16, #tpu.memory_space<vmem>>, %arg3: memref<1x1x256xf32, #tpu.memory_space<vmem>>, %arg4: memref<1x16x128xf32, #tpu.memory_space<vmem>>, %arg5: memref<1x256xf32, #tpu.memory_space<vmem>>, %arg6: memref<1x256xf32, #tpu.memory_space<vmem>>, %arg7: memref<256x128xbf16, #tpu.memory_space<vmem>>, %arg8: memref<1x128xf32, #tpu.memory_space<vmem>>, %arg9: memref<1x16x128xf32, #tpu.memory_space<vmem>>) attributes {dimension_semantics = [#tpu.dimension_semantics<parallel>, #tpu.dimension_semantics<parallel>], iteration_bounds = array<i64: 2, 4>, scalar_prefetch = 0 : i64, scratch_operands = 0 : i64, tpu.core_type = #tpu.core_type<tc>, window_params = [{transform_indices = @transform_0, window_bounds = array<i64: 1, 16, 256>}, {transform_indices = @transform_1, window_bounds = array<i64: 1, 1, 256>}, {transform_indices = @transform_2, window_bounds = array<i64: 1, 16, 128>}, {pipeline_mode = #tpu.pipeline_mode<synchronous>, transform_indices = @transform_3, window_bounds = array<i64: 1, 256>}, {pipeline_mode = #tpu.pipeline_mode<synchronous>, transform_indices = @transform_4, window_bounds = array<i64: 1, 256>}, {pipeline_mode = #tpu.pipeline_mode<synchronous>, transform_indices = @transform_5, window_bounds = array<i64: 256, 128>}, {pipeline_mode = #tpu.pipeline_mode<synchronous>, transform_indices = @transform_6, window_bounds = array<i64: 1, 128>}, {transform_indices = @transform_7, window_bounds = array<i64: 1, 16, 128>}]} {
    %c0 = arith.constant 0 : index
    %c0_0 = arith.constant 0 : index
    %c0_1 = arith.constant 0 : index
    %0 = vector.load %arg3[%c0, %c0_0, %c0_1] : memref<1x1x256xf32, #tpu.memory_space<vmem>>, vector<1x1x256xf32>
    %1 = vector.shape_cast %0 : vector<1x1x256xf32> to vector<1x256xf32>
    %2 = math.sqrt %1 : vector<1x256xf32>
    %cst = arith.constant dense<0.000000e+00> : vector<1xf32>
    %3 = vector.multi_reduction <add>, %2, %cst [1] : vector<1x256xf32> to vector<1xf32>
    %4 = vector.shape_cast %3 : vector<1xf32> to vector<1x1xf32>
    %cst_2 = arith.constant 2.560000e+02 : f32
    %5 = vector.broadcast %cst_2 : f32 to vector<1x1xf32>
    %6 = arith.divf %4, %5 : vector<1x1xf32>
    %7 = tpu.reciprocal %6 {approx = true} : vector<1x1xf32> -> vector<1x1xf32>
    %8 = vector.broadcast %7 : vector<1x1xf32> to vector<1x256xf32>
    %9 = arith.mulf %2, %8 : vector<1x256xf32>
    %c0_3 = arith.constant 0 : index
    %c0_4 = arith.constant 0 : index
    %c0_5 = arith.constant 0 : index
    %10 = vector.load %arg2[%c0_3, %c0_4, %c0_5] : memref<1x16x256xbf16, #tpu.memory_space<vmem>>, vector<1x16x256xbf16>
    %11 = vector.shape_cast %10 : vector<1x16x256xbf16> to vector<16x256xbf16>
    %12 = arith.extf %11 : vector<16x256xbf16> to vector<16x256xf32>
    %c0_6 = arith.constant 0 : index
    %c0_7 = arith.constant 0 : index
    %13 = vector.load %arg5[%c0_6, %c0_7] : memref<1x256xf32, #tpu.memory_space<vmem>>, vector<1x256xf32>
    %14 = vector.shape_cast %13 : vector<1x256xf32> to vector<256xf32>
    %15 = vector.shape_cast %14 : vector<256xf32> to vector<1x256xf32>
    %16 = vector.broadcast %9 : vector<1x256xf32> to vector<16x256xf32>
    %17 = arith.mulf %16, %12 : vector<16x256xf32>
    %18 = vector.broadcast %15 : vector<1x256xf32> to vector<16x256xf32>
    %19 = arith.mulf %18, %17 : vector<16x256xf32>
    %c0_8 = arith.constant 0 : index
    %c0_9 = arith.constant 0 : index
    %20 = vector.load %arg6[%c0_8, %c0_9] : memref<1x256xf32, #tpu.memory_space<vmem>>, vector<1x256xf32>
    %21 = vector.shape_cast %20 : vector<1x256xf32> to vector<256xf32>
    %22 = vector.shape_cast %21 : vector<256xf32> to vector<1x256xf32>
    %23 = vector.broadcast %22 : vector<1x256xf32> to vector<16x256xf32>
    %24 = arith.addf %19, %23 : vector<16x256xf32>
    %25 = arith.addf %24, %12 : vector<16x256xf32>
    %26 = arith.truncf %25 : vector<16x256xf32> to vector<16x256xbf16>
    %c0_10 = arith.constant 0 : index
    %c0_11 = arith.constant 0 : index
    %27 = vector.load %arg7[%c0_10, %c0_11] : memref<256x128xbf16, #tpu.memory_space<vmem>>, vector<256x128xbf16>
    %cst_12 = arith.constant dense<0.000000e+00> : vector<16x128xf32>
    %28 = tpu.matmul %26, %27, %cst_12 {dimension_numbers = #tpu.dot_dimension_numbers<[1], [0], [0], [1], [0, 0, 1, 1], [], []>} : vector<16x256xbf16>, vector<256x128xbf16>, vector<16x128xf32> -> vector<16x128xf32>
    %c0_13 = arith.constant 0 : index
    %c0_14 = arith.constant 0 : index
    %29 = vector.load %arg8[%c0_13, %c0_14] : memref<1x128xf32, #tpu.memory_space<vmem>>, vector<1x128xf32>
    %30 = vector.shape_cast %29 : vector<1x128xf32> to vector<128xf32>
    %31 = vector.shape_cast %30 : vector<128xf32> to vector<1x128xf32>
    %32 = vector.broadcast %31 : vector<1x128xf32> to vector<16x128xf32>
    %33 = arith.addf %28, %32 : vector<16x128xf32>
    %c0_15 = arith.constant 0 : index
    %c0_16 = arith.constant 0 : index
    %c0_17 = arith.constant 0 : index
    %34 = vector.load %arg4[%c0_15, %c0_16, %c0_17] : memref<1x16x128xf32, #tpu.memory_space<vmem>>, vector<1x16x128xf32>
    %35 = vector.shape_cast %34 : vector<1x16x128xf32> to vector<16x128xf32>
    %36 = arith.addf %35, %33 : vector<16x128xf32>
    %c0_18 = arith.constant 0 : index
    %c0_19 = arith.constant 0 : index
    %c0_20 = arith.constant 0 : index
    %37 = vector.load %arg9[%c0_18, %c0_19, %c0_20] : memref<1x16x128xf32, #tpu.memory_space<vmem>>, vector<1x16x128xf32>
    %38 = vector.shape_cast %37 : vector<1x16x128xf32> to vector<16x128xf32>
    %39 = vector.shape_cast %36 : vector<16x128xf32> to vector<1x16x128xf32>
    tpu.vector_store %arg9[%c0_18, %c0_19, %c0_20], %39 {strides = array<i32>} : memref<1x16x128xf32, #tpu.memory_space<vmem>>, vector<1x16x128xf32>,
    return
  }
  func.func @transform_0(%arg0: i32, %arg1: i32) -> (i32, i32, i32) {
    %c0_i32 = arith.constant 0 : i32
    %c0_i32_0 = arith.constant 0 : i32
    return %arg0, %arg1, %c0_i32 : i32, i32, i32
  }
  func.func @transform_1(%arg0: i32, %arg1: i32) -> (i32, i32, i32) {
    %c0_i32 = arith.constant 0 : i32
    %c0_i32_0 = arith.constant 0 : i32
    %c0_i32_1 = arith.constant 0 : i32
    return %arg0, %c0_i32, %c0_i32_0 : i32, i32, i32
  }
  func.func @transform_2(%arg0: i32, %arg1: i32) -> (i32, i32, i32) {
    %c0_i32 = arith.constant 0 : i32
    %c0_i32_0 = arith.constant 0 : i32
    return %arg0, %arg1, %c0_i32 : i32, i32, i32
  }
  func.func @transform_3(%arg0: i32, %arg1: i32) -> (i32, i32) {
    %c0_i32 = arith.constant 0 : i32
    %c0_i32_0 = arith.constant 0 : i32
    %c0_i32_1 = arith.constant 0 : i32
    return %c0_i32, %c0_i32_0 : i32, i32
  }
  func.func @transform_4(%arg0: i32, %arg1: i32) -> (i32, i32) {
    %c0_i32 = arith.constant 0 : i32
    %c0_i32_0 = arith.constant 0 : i32
    %c0_i32_1 = arith.constant 0 : i32
    return %c0_i32, %c0_i32_0 : i32, i32
  }
  func.func @transform_5(%arg0: i32, %arg1: i32) -> (i32, i32) {
    %c0_i32 = arith.constant 0 : i32
    %c0_i32_0 = arith.constant 0 : i32
    %c0_i32_1 = arith.constant 0 : i32
    return %c0_i32, %c0_i32_0 : i32, i32
  }
  func.func @transform_6(%arg0: i32, %arg1: i32) -> (i32, i32) {
    %c0_i32 = arith.constant 0 : i32
    %c0_i32_0 = arith.constant 0 : i32
    %c0_i32_1 = arith.constant 0 : i32
    return %c0_i32, %c0_i32_0 : i32, i32
  }
  func.func @transform_7(%arg0: i32, %arg1: i32) -> (i32, i32, i32) {
    %c0_i32 = arith.constant 0 : i32
    %c0_i32_0 = arith.constant 0 : i32
    return %arg0, %arg1, %c0_i32 : i32, i32, i32
  }
}

module attributes {stable_mosaic.version = 11 : i64} {
  func.func @_pass1_kernel(%arg0: i32, %arg1: i32, %arg2: memref<1x16x128xf32, #tpu.memory_space<vmem>>, %arg3: memref<1x1x8x128xf32, #tpu.memory_space<vmem>>, %arg4: memref<1x1x8x128xf32, #tpu.memory_space<vmem>>, %arg5: memref<7x128xf32, #tpu.memory_space<vmem>>, %arg6: memref<1x128xf32, #tpu.memory_space<vmem>>, %arg7: memref<1x128xf32, #tpu.memory_space<vmem>>, %arg8: memref<1x128xf32, #tpu.memory_space<vmem>>, %arg9: memref<128x256xbf16, #tpu.memory_space<vmem>>, %arg10: memref<1x256xf32, #tpu.memory_space<vmem>>, %arg11: memref<1x16x256xbf16, #tpu.memory_space<vmem>>, %arg12: memref<1x8x256xf32, #tpu.memory_space<vmem>>) attributes {dimension_semantics = [#tpu.dimension_semantics<parallel>, #tpu.dimension_semantics<parallel>], iteration_bounds = array<i64: 2, 4>, scalar_prefetch = 0 : i64, scratch_operands = 0 : i64, tpu.core_type = #tpu.core_type<tc>, window_params = [{transform_indices = @transform_0, window_bounds = array<i64: 1, 16, 128>}, {transform_indices = @transform_1, window_bounds = array<i64: 1, 1, 8, 128>}, {transform_indices = @transform_2, window_bounds = array<i64: 1, 1, 8, 128>}, {pipeline_mode = #tpu.pipeline_mode<synchronous>, transform_indices = @transform_3, window_bounds = array<i64: 7, 128>}, {pipeline_mode = #tpu.pipeline_mode<synchronous>, transform_indices = @transform_4, window_bounds = array<i64: 1, 128>}, {pipeline_mode = #tpu.pipeline_mode<synchronous>, transform_indices = @transform_5, window_bounds = array<i64: 1, 128>}, {pipeline_mode = #tpu.pipeline_mode<synchronous>, transform_indices = @transform_6, window_bounds = array<i64: 1, 128>}, {pipeline_mode = #tpu.pipeline_mode<synchronous>, transform_indices = @transform_7, window_bounds = array<i64: 128, 256>}, {pipeline_mode = #tpu.pipeline_mode<synchronous>, transform_indices = @transform_8, window_bounds = array<i64: 1, 256>}, {transform_indices = @transform_9, window_bounds = array<i64: 1, 16, 256>}, {transform_indices = @transform_10, window_bounds = array<i64: 1, 8, 256>}]} {
    %c0 = arith.constant 0 : index
    %c0_0 = arith.constant 0 : index
    %c0_1 = arith.constant 0 : index
    %0 = vector.load %arg2[%c0, %c0_0, %c0_1] : memref<1x16x128xf32, #tpu.memory_space<vmem>>, vector<1x16x128xf32>
    %1 = vector.shape_cast %0 : vector<1x16x128xf32> to vector<16x128xf32>
    %c0_2 = arith.constant 0 : index
    %c0_3 = arith.constant 0 : index
    %c0_4 = arith.constant 0 : index
    %c0_5 = arith.constant 0 : index
    %2 = vector.load %arg3[%c0_2, %c0_3, %c0_4, %c0_5] : memref<1x1x8x128xf32, #tpu.memory_space<vmem>>, vector<1x1x8x128xf32>
    %3 = vector.shape_cast %2 : vector<1x1x8x128xf32> to vector<8x128xf32>
    %c0_6 = arith.constant 0 : index
    %c0_7 = arith.constant 0 : index
    %c0_8 = arith.constant 0 : index
    %c0_9 = arith.constant 0 : index
    %4 = vector.load %arg4[%c0_6, %c0_7, %c0_8, %c0_9] : memref<1x1x8x128xf32, #tpu.memory_space<vmem>>, vector<1x1x8x128xf32>
    %5 = vector.shape_cast %4 : vector<1x1x8x128xf32> to vector<8x128xf32>
    %6 = tpu.concatenate %3, %1, %5 in 0 : vector<8x128xf32>, vector<16x128xf32>, vector<8x128xf32> -> vector<32x128xf32>
    %c0_10 = arith.constant 0 : index
    %c0_11 = arith.constant 0 : index
    %7 = vector.load %arg5[%c0_10, %c0_11] : memref<7x128xf32, #tpu.memory_space<vmem>>, vector<7x128xf32>
    %8 = vector.extract_strided_slice %6 {offsets = [5, 0], sizes = [16, 128], strides = [1, 1]} : vector<32x128xf32> to vector<16x128xf32>
    %9 = vector.extract_strided_slice %7 {offsets = [0, 0], sizes = [1, 128], strides = [1, 1]} : vector<7x128xf32> to vector<1x128xf32>
    %10 = vector.shape_cast %9 : vector<1x128xf32> to vector<128xf32>
    %11 = vector.shape_cast %10 : vector<128xf32> to vector<1x128xf32>
    %12 = vector.broadcast %11 : vector<1x128xf32> to vector<16x128xf32>
    %13 = arith.mulf %8, %12 : vector<16x128xf32>
    %14 = vector.extract_strided_slice %6 {offsets = [6, 0], sizes = [16, 128], strides = [1, 1]} : vector<32x128xf32> to vector<16x128xf32>
    %15 = vector.extract_strided_slice %7 {offsets = [1, 0], sizes = [1, 128], strides = [1, 1]} : vector<7x128xf32> to vector<1x128xf32>
    %16 = vector.shape_cast %15 : vector<1x128xf32> to vector<128xf32>
    %17 = vector.shape_cast %16 : vector<128xf32> to vector<1x128xf32>
    %18 = vector.broadcast %17 : vector<1x128xf32> to vector<16x128xf32>
    %19 = arith.mulf %14, %18 : vector<16x128xf32>
    %20 = arith.addf %13, %19 : vector<16x128xf32>
    %21 = vector.extract_strided_slice %6 {offsets = [7, 0], sizes = [16, 128], strides = [1, 1]} : vector<32x128xf32> to vector<16x128xf32>
    %22 = vector.extract_strided_slice %7 {offsets = [2, 0], sizes = [1, 128], strides = [1, 1]} : vector<7x128xf32> to vector<1x128xf32>
    %23 = vector.shape_cast %22 : vector<1x128xf32> to vector<128xf32>
    %24 = vector.shape_cast %23 : vector<128xf32> to vector<1x128xf32>
    %25 = vector.broadcast %24 : vector<1x128xf32> to vector<16x128xf32>
    %26 = arith.mulf %21, %25 : vector<16x128xf32>
    %27 = arith.addf %20, %26 : vector<16x128xf32>
    %28 = vector.extract_strided_slice %6 {offsets = [8, 0], sizes = [16, 128], strides = [1, 1]} : vector<32x128xf32> to vector<16x128xf32>
    %29 = vector.extract_strided_slice %7 {offsets = [3, 0], sizes = [1, 128], strides = [1, 1]} : vector<7x128xf32> to vector<1x128xf32>
    %30 = vector.shape_cast %29 : vector<1x128xf32> to vector<128xf32>
    %31 = vector.shape_cast %30 : vector<128xf32> to vector<1x128xf32>
    %32 = vector.broadcast %31 : vector<1x128xf32> to vector<16x128xf32>
    %33 = arith.mulf %28, %32 : vector<16x128xf32>
    %34 = arith.addf %27, %33 : vector<16x128xf32>
    %35 = vector.extract_strided_slice %6 {offsets = [9, 0], sizes = [16, 128], strides = [1, 1]} : vector<32x128xf32> to vector<16x128xf32>
    %36 = vector.extract_strided_slice %7 {offsets = [4, 0], sizes = [1, 128], strides = [1, 1]} : vector<7x128xf32> to vector<1x128xf32>
    %37 = vector.shape_cast %36 : vector<1x128xf32> to vector<128xf32>
    %38 = vector.shape_cast %37 : vector<128xf32> to vector<1x128xf32>
    %39 = vector.broadcast %38 : vector<1x128xf32> to vector<16x128xf32>
    %40 = arith.mulf %35, %39 : vector<16x128xf32>
    %41 = arith.addf %34, %40 : vector<16x128xf32>
    %42 = vector.extract_strided_slice %6 {offsets = [10, 0], sizes = [16, 128], strides = [1, 1]} : vector<32x128xf32> to vector<16x128xf32>
    %43 = vector.extract_strided_slice %7 {offsets = [5, 0], sizes = [1, 128], strides = [1, 1]} : vector<7x128xf32> to vector<1x128xf32>
    %44 = vector.shape_cast %43 : vector<1x128xf32> to vector<128xf32>
    %45 = vector.shape_cast %44 : vector<128xf32> to vector<1x128xf32>
    %46 = vector.broadcast %45 : vector<1x128xf32> to vector<16x128xf32>
    %47 = arith.mulf %42, %46 : vector<16x128xf32>
    %48 = arith.addf %41, %47 : vector<16x128xf32>
    %49 = vector.extract_strided_slice %6 {offsets = [11, 0], sizes = [16, 128], strides = [1, 1]} : vector<32x128xf32> to vector<16x128xf32>
    %50 = vector.extract_strided_slice %7 {offsets = [6, 0], sizes = [1, 128], strides = [1, 1]} : vector<7x128xf32> to vector<1x128xf32>
    %51 = vector.shape_cast %50 : vector<1x128xf32> to vector<128xf32>
    %52 = vector.shape_cast %51 : vector<128xf32> to vector<1x128xf32>
    %53 = vector.broadcast %52 : vector<1x128xf32> to vector<16x128xf32>
    %54 = arith.mulf %49, %53 : vector<16x128xf32>
    %55 = arith.addf %48, %54 : vector<16x128xf32>
    %c0_12 = arith.constant 0 : index
    %c0_13 = arith.constant 0 : index
    %56 = vector.load %arg6[%c0_12, %c0_13] : memref<1x128xf32, #tpu.memory_space<vmem>>, vector<1x128xf32>
    %57 = vector.shape_cast %56 : vector<1x128xf32> to vector<128xf32>
    %58 = vector.shape_cast %57 : vector<128xf32> to vector<1x128xf32>
    %59 = vector.broadcast %58 : vector<1x128xf32> to vector<16x128xf32>
    %60 = arith.addf %55, %59 : vector<16x128xf32>
    %cst = arith.constant dense<0.000000e+00> : vector<16xf32>
    %61 = vector.multi_reduction <add>, %60, %cst [1] : vector<16x128xf32> to vector<16xf32>
    %62 = vector.shape_cast %61 : vector<16xf32> to vector<16x1xf32>
    %cst_14 = arith.constant 1.280000e+02 : f32
    %63 = vector.broadcast %cst_14 : f32 to vector<16x1xf32>
    %64 = arith.divf %62, %63 : vector<16x1xf32>
    %65 = vector.broadcast %64 : vector<16x1xf32> to vector<16x128xf32>
    %66 = arith.subf %60, %65 : vector<16x128xf32>
    %67 = arith.mulf %66, %66 : vector<16x128xf32>
    %cst_15 = arith.constant dense<0.000000e+00> : vector<16xf32>
    %68 = vector.multi_reduction <add>, %67, %cst_15 [1] : vector<16x128xf32> to vector<16xf32>
    %69 = vector.shape_cast %68 : vector<16xf32> to vector<16x1xf32>
    %cst_16 = arith.constant 1.280000e+02 : f32
    %70 = vector.broadcast %cst_16 : f32 to vector<16x1xf32>
    %71 = arith.divf %69, %70 : vector<16x1xf32>
    %72 = vector.broadcast %64 : vector<16x1xf32> to vector<16x128xf32>
    %73 = arith.subf %60, %72 : vector<16x128xf32>
    %cst_17 = arith.constant 9.99999974E-6 : f32
    %74 = vector.broadcast %cst_17 : f32 to vector<16x1xf32>
    %75 = arith.addf %71, %74 : vector<16x1xf32>
    %76 = math.rsqrt %75 : vector<16x1xf32>
    %77 = vector.broadcast %76 : vector<16x1xf32> to vector<16x128xf32>
    %78 = arith.mulf %73, %77 : vector<16x128xf32>
    %c0_18 = arith.constant 0 : index
    %c0_19 = arith.constant 0 : index
    %79 = vector.load %arg7[%c0_18, %c0_19] : memref<1x128xf32, #tpu.memory_space<vmem>>, vector<1x128xf32>
    %80 = vector.shape_cast %79 : vector<1x128xf32> to vector<128xf32>
    %81 = vector.shape_cast %80 : vector<128xf32> to vector<1x128xf32>
    %82 = vector.broadcast %81 : vector<1x128xf32> to vector<16x128xf32>
    %83 = arith.mulf %78, %82 : vector<16x128xf32>
    %c0_20 = arith.constant 0 : index
    %c0_21 = arith.constant 0 : index
    %84 = vector.load %arg8[%c0_20, %c0_21] : memref<1x128xf32, #tpu.memory_space<vmem>>, vector<1x128xf32>
    %85 = vector.shape_cast %84 : vector<1x128xf32> to vector<128xf32>
    %86 = vector.shape_cast %85 : vector<128xf32> to vector<1x128xf32>
    %87 = vector.broadcast %86 : vector<1x128xf32> to vector<16x128xf32>
    %88 = arith.addf %83, %87 : vector<16x128xf32>
    %89 = arith.truncf %88 : vector<16x128xf32> to vector<16x128xbf16>
    %c0_22 = arith.constant 0 : index
    %c0_23 = arith.constant 0 : index
    %90 = vector.load %arg9[%c0_22, %c0_23] : memref<128x256xbf16, #tpu.memory_space<vmem>>, vector<128x256xbf16>
    %cst_24 = arith.constant dense<0.000000e+00> : vector<16x256xf32>
    %91 = tpu.matmul %89, %90, %cst_24 {dimension_numbers = #tpu.dot_dimension_numbers<[1], [0], [0], [1], [0, 0, 1, 1], [], []>} : vector<16x128xbf16>, vector<128x256xbf16>, vector<16x256xf32> -> vector<16x256xf32>
    %c0_25 = arith.constant 0 : index
    %c0_26 = arith.constant 0 : index
    %92 = vector.load %arg10[%c0_25, %c0_26] : memref<1x256xf32, #tpu.memory_space<vmem>>, vector<1x256xf32>
    %93 = vector.shape_cast %92 : vector<1x256xf32> to vector<256xf32>
    %94 = vector.shape_cast %93 : vector<256xf32> to vector<1x256xf32>
    %95 = vector.broadcast %94 : vector<1x256xf32> to vector<16x256xf32>
    %96 = arith.addf %91, %95 : vector<16x256xf32>
    %cst_27 = arith.constant 5.000000e-01 : f32
    %97 = vector.broadcast %cst_27 : f32 to vector<16x256xf32>
    %98 = arith.mulf %97, %96 : vector<16x256xf32>
    %cst_28 = arith.constant 0.707106769 : f32
    %99 = vector.broadcast %cst_28 : f32 to vector<16x256xf32>
    %100 = arith.mulf %96, %99 : vector<16x256xf32>
    %101 = math.erf %100 : vector<16x256xf32>
    %cst_29 = arith.constant 1.000000e+00 : f32
    %102 = vector.broadcast %cst_29 : f32 to vector<16x256xf32>
    %103 = arith.addf %102, %101 : vector<16x256xf32>
    %104 = arith.mulf %98, %103 : vector<16x256xf32>
    %105 = arith.mulf %104, %104 : vector<16x256xf32>
    %cst_30 = arith.constant dense<0.000000e+00> : vector<256xf32>
    %106 = vector.multi_reduction <add>, %105, %cst_30 [0] : vector<16x256xf32> to vector<256xf32>
    %107 = vector.shape_cast %106 : vector<256xf32> to vector<1x256xf32>
    %108 = vector.shape_cast %107 : vector<1x256xf32> to vector<1x256xf32>
    %109 = vector.broadcast %108 : vector<1x256xf32> to vector<8x256xf32>
    %c0_31 = arith.constant 0 : index
    %c0_32 = arith.constant 0 : index
    %c0_33 = arith.constant 0 : index
    %110 = vector.load %arg12[%c0_31, %c0_32, %c0_33] : memref<1x8x256xf32, #tpu.memory_space<vmem>>, vector<1x8x256xf32>
    %111 = vector.shape_cast %110 : vector<1x8x256xf32> to vector<8x256xf32>
    %112 = vector.shape_cast %109 : vector<8x256xf32> to vector<1x8x256xf32>
    tpu.vector_store %arg12[%c0_31, %c0_32, %c0_33], %112 {strides = array<i32>} : memref<1x8x256xf32, #tpu.memory_space<vmem>>, vector<1x8x256xf32>,
    %113 = arith.truncf %104 : vector<16x256xf32> to vector<16x256xbf16>
    %c0_34 = arith.constant 0 : index
    %c0_35 = arith.constant 0 : index
    %c0_36 = arith.constant 0 : index
    %114 = vector.load %arg11[%c0_34, %c0_35, %c0_36] : memref<1x16x256xbf16, #tpu.memory_space<vmem>>, vector<1x16x256xbf16>
    %115 = vector.shape_cast %114 : vector<1x16x256xbf16> to vector<16x256xbf16>
    %116 = vector.shape_cast %113 : vector<16x256xbf16> to vector<1x16x256xbf16>
    tpu.vector_store %arg11[%c0_34, %c0_35, %c0_36], %116 {strides = array<i32>} : memref<1x16x256xbf16, #tpu.memory_space<vmem>>, vector<1x16x256xbf16>,
    return
  }
  func.func @transform_0(%arg0: i32, %arg1: i32) -> (i32, i32, i32) {
    %c0_i32 = arith.constant 0 : i32
    %c0_i32_0 = arith.constant 0 : i32
    return %arg0, %arg1, %c0_i32 : i32, i32, i32
  }
  func.func @transform_1(%arg0: i32, %arg1: i32) -> (i32, i32, i32, i32) {
    %c0_i32 = arith.constant 0 : i32
    %c0_i32_0 = arith.constant 0 : i32
    %c0_i32_1 = arith.constant 0 : i32
    return %arg0, %arg1, %c0_i32, %c0_i32_0 : i32, i32, i32, i32
  }
  func.func @transform_2(%arg0: i32, %arg1: i32) -> (i32, i32, i32, i32) {
    %c0_i32 = arith.constant 0 : i32
    %c0_i32_0 = arith.constant 0 : i32
    %c0_i32_1 = arith.constant 0 : i32
    return %arg0, %arg1, %c0_i32, %c0_i32_0 : i32, i32, i32, i32
  }
  func.func @transform_3(%arg0: i32, %arg1: i32) -> (i32, i32) {
    %c0_i32 = arith.constant 0 : i32
    %c0_i32_0 = arith.constant 0 : i32
    %c0_i32_1 = arith.constant 0 : i32
    return %c0_i32, %c0_i32_0 : i32, i32
  }
  func.func @transform_4(%arg0: i32, %arg1: i32) -> (i32, i32) {
    %c0_i32 = arith.constant 0 : i32
    %c0_i32_0 = arith.constant 0 : i32
    %c0_i32_1 = arith.constant 0 : i32
    return %c0_i32, %c0_i32_0 : i32, i32
  }
  func.func @transform_5(%arg0: i32, %arg1: i32) -> (i32, i32) {
    %c0_i32 = arith.constant 0 : i32
    %c0_i32_0 = arith.constant 0 : i32
    %c0_i32_1 = arith.constant 0 : i32
    return %c0_i32, %c0_i32_0 : i32, i32
  }
  func.func @transform_6(%arg0: i32, %arg1: i32) -> (i32, i32) {
    %c0_i32 = arith.constant 0 : i32
    %c0_i32_0 = arith.constant 0 : i32
    %c0_i32_1 = arith.constant 0 : i32
    return %c0_i32, %c0_i32_0 : i32, i32
  }
  func.func @transform_7(%arg0: i32, %arg1: i32) -> (i32, i32) {
    %c0_i32 = arith.constant 0 : i32
    %c0_i32_0 = arith.constant 0 : i32
    %c0_i32_1 = arith.constant 0 : i32
    return %c0_i32, %c0_i32_0 : i32, i32
  }
  func.func @transform_8(%arg0: i32, %arg1: i32) -> (i32, i32) {
    %c0_i32 = arith.constant 0 : i32
    %c0_i32_0 = arith.constant 0 : i32
    %c0_i32_1 = arith.constant 0 : i32
    return %c0_i32, %c0_i32_0 : i32, i32
  }
  func.func @transform_9(%arg0: i32, %arg1: i32) -> (i32, i32, i32) {
    %c0_i32 = arith.constant 0 : i32
    %c0_i32_0 = arith.constant 0 : i32
    return %arg0, %arg1, %c0_i32 : i32, i32, i32
  }
  func.func @transform_10(%arg0: i32, %arg1: i32) -> (i32, i32, i32) {
    %c0_i32 = arith.constant 0 : i32
    %c0_i32_0 = arith.constant 0 : i32
    return %arg0, %arg1, %c0_i32 : i32, i32, i32
  }
}

</mosaic_0001>

<llo_original>
// kernel: convnext_layer.3
$region0: #{convnext_layer.3}
  #allocation0 [shape = 'u32[]', space=smem, size = 0x4, offset = 0x4, fixed_abs, tag = 'smem constant byte address 0x4 - core index']
  #allocation1 [shape = 'u32[72,128]{1,0:T(1,128)}', space=vmem, size = 0x9000, scoped, tag = 'internal scratch']
  %s0 = inlined_call_operand.vmem [shape: bf16[2,64,256], index: 0, kind: input, shape index: {}]
  %s1 = inlined_call_operand.vmem [shape: f32[2,1,256], index: 1, kind: input, shape index: {}]
  %s2 = inlined_call_operand.vmem [shape: f32[2,64,128], index: 2, kind: input, shape index: {}]
  %s3 = inlined_call_operand.vmem [shape: f32[1,256], index: 3, kind: input, shape index: {}]
  %s4 = inlined_call_operand.vmem [shape: f32[1,256], index: 4, kind: input, shape index: {}]
  %s5 = inlined_call_operand.vmem [shape: bf16[256,128], index: 5, kind: input, shape index: {}]
  %s6 = inlined_call_operand.vmem [shape: f32[1,128], index: 6, kind: input, shape index: {}]
  %s7 = inlined_call_operand.hbm [shape: f32[2,64,128], index: 7, kind: output, shape index: {}]
  %s8 = sld [smem:[#allocation0]]
  $region61: #{convnext_layer.3} parent=0
    _
  %s10 = ssub.s32 1, %s8
  %s11 = scalar_select 0, %s10, %s8
  $region1: #{convnext_layer.3} parent=0
    #allocation2 [shape = 'u8[16384]{0}', space=vmem, size = 0x4000, scoped, tag = 'output window, operand 0']
    #allocation3 [shape = 's32[2]{0}', space=sflag, size = 0x8, scoped, tag = 'scoped memory for convnext_layer.3']
    %12 = vsyncpa [#allocation3], 0
    %s13 = scalar_lea.sflag [#allocation3], 1
    %14 = vsyncpa %s13, 0
    loop: start=0, step=1, limit=10
    $region2: #{convnext_layer.3} parent=1 // loop_pre_header
      _
    $region3: #{convnext_layer.3} parent=1 // loop_header
      %s16 = sphi 0, %s20
      %p17 = scmp.ge.s32.totalorder %s16, 10
      %s23 = sphi 0, %s35
      %s24 = sphi 0, %s31
      %s25 = sphi 0, %s23
      %s26 = sphi 0, %s24
      %s27 = sphi 0, %s25
      %s28 = sphi 0, %s26
      %s40 = sphi 0, %s42
      %s43 = sphi 0, %s40
      %s44 = sphi 0, %s43
      %s60 = sphi 0, %s44
      %s66 = sphi 0, %s68
      %s69 = sphi 0, %s66
      %s70 = sphi 0, %s69
      %s86 = sphi 0, %s70
      %s94 = sphi 0, %s96
      %s97 = sphi 0, %s94
      %s98 = sphi 0, %s97
      %s114 = sphi 0, %s98
      %s118 = sphi 0, %s118
      %s120 = sphi 0, %s118
      %s121 = sphi 0, %s120
      %s135 = sphi 0, %s121
      %s139 = sphi 0, %s139
      %s141 = sphi 0, %s139
      %s142 = sphi 0, %s141
      %s156 = sphi 0, %s142
      %s160 = sphi 0, %s160
      %s162 = sphi 0, %s160
      %s163 = sphi 0, %s162
      %s177 = sphi 0, %s163
      %s181 = sphi 0, %s181
      %s183 = sphi 0, %s181
      %s184 = sphi 0, %s183
      %s198 = sphi 0, %s184
      %s206 = sphi 0, %s208
      %s209 = sphi 0, %s206
      %s210 = sphi 0, %s209
      %s226 = sphi 0, %s210
    $region4: #{convnext_layer.3} parent=1 // loop_header_branch
      %19 = sbr.rel (%p17) target = $region8
    $region5: #{convnext_layer.3} parent=1 // loop_body
      %s21 = ssub.s32 %s16, 1
      %s22 = ssub.s32 %s16, 2
      %s29 = sadd.s32 1, %s24
      %p30 = scmp.ge.s32.totalorder %s29, 4
      %s31 = scalar_select %p30, 0, %s29
      %s32 = sadd.s32 1, %s23
      %s33 = scalar_select %p30, %s32, %s23
      %p34 = scmp.ge.s32.totalorder %s33, 2
      %s35 = scalar_select %p34, 0, %s33
      %s36 = ssub.s32 %s23, %s35
      %s37 = ssub.s32 %s24, %s31
      %s38 = sor.u32 %s36, %s37
      %p39 = scmp.eq.s32.totalorder %s38, 0
      %s41 = sadd.s32 %s40, 1
      %s42 = scalar_select %p39, %s40, %s41
      %p45 = pneg %p39
      %p46 = scmp.eq.s32.totalorder %s16, 7
      %p47 = por %p45, %p46
      %p48 = scmp.ne.s32.totalorder %s40, %s43
      %p49 = scmp.eq.s32.totalorder %s16, 0
      %p50 = por %p48, %p49
      %p51 = scmp.ne.s32.totalorder %s40, %s43
      %p52 = scmp.eq.s32.totalorder %s21, 7
      %p53 = por %p51, %p52
      %p54 = scmp.ne.s32.totalorder %s43, %s44
      %p55 = scmp.eq.s32.totalorder %s21, 0
      %p56 = por %p54, %p55
      %p57 = scmp.ne.s32.totalorder %s43, %s44
      %p58 = scmp.eq.s32.totalorder %s22, 7
      %p59 = por %p57, %p58
      %p61 = scmp.ne.s32.totalorder %s44, %s60
      %p62 = scmp.eq.s32.totalorder %s22, 0
      %p63 = por %p61, %p62
      %s64 = ssub.s32 %s23, %s35
      %p65 = scmp.eq.s32.totalorder %s64, 0
      %s67 = sadd.s32 %s66, 1
      %s68 = scalar_select %p65, %s66, %s67
      %p71 = pneg %p65
      %p72 = scmp.eq.s32.totalorder %s16, 7
      %p73 = por %p71, %p72
      %p74 = scmp.ne.s32.totalorder %s66, %s69
      %p75 = scmp.eq.s32.totalorder %s16, 0
      %p76 = por %p74, %p75
      %p77 = scmp.ne.s32.totalorder %s66, %s69
      %p78 = scmp.eq.s32.totalorder %s21, 7
      %p79 = por %p77, %p78
      %p80 = scmp.ne.s32.totalorder %s69, %s70
      %p81 = scmp.eq.s32.totalorder %s21, 0
      %p82 = por %p80, %p81
      %p83 = scmp.ne.s32.totalorder %s69, %s70
      %p84 = scmp.eq.s32.totalorder %s22, 7
      %p85 = por %p83, %p84
      %p87 = scmp.ne.s32.totalorder %s70, %s86
      %p88 = scmp.eq.s32.totalorder %s22, 0
      %p89 = por %p87, %p88
      %s90 = ssub.s32 %s23, %s35
      %s91 = ssub.s32 %s24, %s31
      %s92 = sor.u32 %s90, %s91
      %p93 = scmp.eq.s32.totalorder %s92, 0
      %s95 = sadd.s32 %s94, 1
      %s96 = scalar_select %p93, %s94, %s95
      %p99 = pneg %p93
      %p100 = scmp.eq.s32.totalorder %s16, 7
      %p101 = por %p99, %p100
      %p102 = scmp.ne.s32.totalorder %s94, %s97
      %p103 = scmp.eq.s32.totalorder %s16, 0
      %p104 = por %p102, %p103
      %p105 = scmp.ne.s32.totalorder %s94, %s97
      %p106 = scmp.eq.s32.totalorder %s21, 7
      %p107 = por %p105, %p106
      %p108 = scmp.ne.s32.totalorder %s97, %s98
      %p109 = scmp.eq.s32.totalorder %s21, 0
      %p110 = por %p108, %p109
      %p111 = scmp.ne.s32.totalorder %s97, %s98
      %p112 = scmp.eq.s32.totalorder %s22, 7
      %p113 = por %p111, %p112
      %p115 = scmp.ne.s32.totalorder %s98, %s114
      %p116 = scmp.eq.s32.totalorder %s22, 0
      %p117 = por %p115, %p116
      %s119 = sadd.s32 %s118, 1
      %p122 = scmp.eq.s32.totalorder %s16, 7
      %p123 = scmp.ne.s32.totalorder %s118, %s120
      %p124 = scmp.eq.s32.totalorder %s16, 0
      %p125 = por %p123, %p124
      %p126 = scmp.ne.s32.totalorder %s118, %s120
      %p127 = scmp.eq.s32.totalorder %s21, 7
      %p128 = por %p126, %p127
      %p129 = scmp.ne.s32.totalorder %s120, %s121
      %p130 = scmp.eq.s32.totalorder %s21, 0
      %p131 = por %p129, %p130
      %p132 = scmp.ne.s32.totalorder %s120, %s121
      %p133 = scmp.eq.s32.totalorder %s22, 7
      %p134 = por %p132, %p133
      %p136 = scmp.ne.s32.totalorder %s121, %s135
      %p137 = scmp.eq.s32.totalorder %s22, 0
      %p138 = por %p136, %p137
      %s140 = sadd.s32 %s139, 1
      %p143 = scmp.eq.s32.totalorder %s16, 7
      %p144 = scmp.ne.s32.totalorder %s139, %s141
      %p145 = scmp.eq.s32.totalorder %s16, 0
      %p146 = por %p144, %p145
      %p147 = scmp.ne.s32.totalorder %s139, %s141
      %p148 = scmp.eq.s32.totalorder %s21, 7
      %p149 = por %p147, %p148
      %p150 = scmp.ne.s32.totalorder %s141, %s142
      %p151 = scmp.eq.s32.totalorder %s21, 0
      %p152 = por %p150, %p151
      %p153 = scmp.ne.s32.totalorder %s141, %s142
      %p154 = scmp.eq.s32.totalorder %s22, 7
      %p155 = por %p153, %p154
      %p157 = scmp.ne.s32.totalorder %s142, %s156
      %p158 = scmp.eq.s32.totalorder %s22, 0
      %p159 = por %p157, %p158
      %s161 = sadd.s32 %s160, 1
      %p164 = scmp.eq.s32.totalorder %s16, 7
      %p165 = scmp.ne.s32.totalorder %s160, %s162
      %p166 = scmp.eq.s32.totalorder %s16, 0
      %p167 = por %p165, %p166
      %p168 = scmp.ne.s32.totalorder %s160, %s162
      %p169 = scmp.eq.s32.totalorder %s21, 7
      %p170 = por %p168, %p169
      %p171 = scmp.ne.s32.totalorder %s162, %s163
      %p172 = scmp.eq.s32.totalorder %s21, 0
      %p173 = por %p171, %p172
      %p174 = scmp.ne.s32.totalorder %s162, %s163
      %p175 = scmp.eq.s32.totalorder %s22, 7
      %p176 = por %p174, %p175
      %p178 = scmp.ne.s32.totalorder %s163, %s177
      %p179 = scmp.eq.s32.totalorder %s22, 0
      %p180 = por %p178, %p179
      %s182 = sadd.s32 %s181, 1
      %p185 = scmp.eq.s32.totalorder %s16, 7
      %p186 = scmp.ne.s32.totalorder %s181, %s183
      %p187 = scmp.eq.s32.totalorder %s16, 0
      %p188 = por %p186, %p187
      %p189 = scmp.ne.s32.totalorder %s181, %s183
      %p190 = scmp.eq.s32.totalorder %s21, 7
      %p191 = por %p189, %p190
      %p192 = scmp.ne.s32.totalorder %s183, %s184
      %p193 = scmp.eq.s32.totalorder %s21, 0
      %p194 = por %p192, %p193
      %p195 = scmp.ne.s32.totalorder %s183, %s184
      %p196 = scmp.eq.s32.totalorder %s22, 7
      %p197 = por %p195, %p196
      %p199 = scmp.ne.s32.totalorder %s184, %s198
      %p200 = scmp.eq.s32.totalorder %s22, 0
      %p201 = por %p199, %p200
      %s202 = ssub.s32 %s23, %s35
      %s203 = ssub.s32 %s24, %s31
      %s204 = sor.u32 %s202, %s203
      %p205 = scmp.eq.s32.totalorder %s204, 0
      %s207 = sadd.s32 %s206, 1
      %s208 = scalar_select %p205, %s206, %s207
      %p211 = pneg %p205
      %p212 = scmp.eq.s32.totalorder %s16, 7
      %p213 = por %p211, %p212
      %p214 = scmp.ne.s32.totalorder %s206, %s209
      %p215 = scmp.eq.s32.totalorder %s16, 0
      %p216 = por %p214, %p215
      %p217 = scmp.ne.s32.totalorder %s206, %s209
      %p218 = scmp.eq.s32.totalorder %s21, 7
      %p219 = por %p217, %p218
      %p220 = scmp.ne.s32.totalorder %s209, %s210
      %p221 = scmp.eq.s32.totalorder %s21, 0
      %p222 = por %p220, %p221
      %p223 = scmp.ne.s32.totalorder %s209, %s210
      %p224 = scmp.eq.s32.totalorder %s22, 7
      %p225 = por %p223, %p224
      %p227 = scmp.ne.s32.totalorder %s210, %s226
      %p228 = scmp.eq.s32.totalorder %s22, 0
      %p229 = por %p227, %p228
      %p230 = scmp.le.s32.totalorder 1, %s16
      %p231 = scmp.lt.s32.totalorder %s16, 9
      %p232 = pnand %p230, %p231
      %p233 = pneg %p232
      // Predicated region
      $region9: #{convnext_layer.3} parent=5 // pred_check
        _
      $region10: #{convnext_layer.3} parent=5 // pred_check_branch
        %235 = sbr.rel (%p232) target = $region12
      $region11: #{convnext_layer.3} parent=5 // pred_region
        %s236 = ssub.s32 %s16, 1
        // Predicated region
        $region13: #{convnext_layer.3} parent=11 // pred_check
          %p237 = pneg %p131
        $region14: #{convnext_layer.3} parent=11 // pred_check_branch
          %239 = sbr.rel (%p237) target = $region16
        $region15: #{convnext_layer.3} parent=11 // pred_region
          _
        $region16: #{convnext_layer.3} parent=11 // pred_fallthru
          _
        // Predicated region
        $region17: #{convnext_layer.3} parent=11 // pred_check
          %p240 = pneg %p152
        $region18: #{convnext_layer.3} parent=11 // pred_check_branch
          %242 = sbr.rel (%p240) target = $region20
        $region19: #{convnext_layer.3} parent=11 // pred_region
          _
        $region20: #{convnext_layer.3} parent=11 // pred_fallthru
          _
        // Predicated region
        $region21: #{convnext_layer.3} parent=11 // pred_check
          %p243 = pneg %p173
        $region22: #{convnext_layer.3} parent=11 // pred_check_branch
          %245 = sbr.rel (%p243) target = $region24
        $region23: #{convnext_layer.3} parent=11 // pred_region
          _
        $region24: #{convnext_layer.3} parent=11 // pred_fallthru
          _
        // Predicated region
        $region25: #{convnext_layer.3} parent=11 // pred_check
          %p246 = pneg %p194
        $region26: #{convnext_layer.3} parent=11 // pred_check_branch
          %248 = sbr.rel (%p246) target = $region28
        $region27: #{convnext_layer.3} parent=11 // pred_region
          _
        $region28: #{convnext_layer.3} parent=11 // pred_fallthru
          _
      $region12: #{convnext_layer.3} parent=5 // pred_fallthru
        _
      %p249 = scmp.lt.s32.totalorder %s16, 8
      // Predicated region
      $region29: #{convnext_layer.3} parent=5 // pred_check
        %p250 = pneg %p249
      $region30: #{convnext_layer.3} parent=5 // pred_check_branch
        %252 = sbr.rel (%p250) target = $region32
      $region31: #{convnext_layer.3} parent=5 // pred_region
        // Predicated region
        $region33: #{convnext_layer.3} parent=31 // pred_check
          %p253 = pneg %p50
        $region34: #{convnext_layer.3} parent=31 // pred_check_branch
          %255 = sbr.rel (%p253) target = $region36
        $region35: #{convnext_layer.3} parent=31 // pred_region
          %s256 = smul.u32 2, %s24
          %p257 = scmp.lt.s32.totalorder %s23, 1
          %s258 = scalar_select %p257, %s23, 1
          %p259 = scmp.lt.s32.totalorder %s256, 7
          %s260 = scalar_select %p259, %s256, 7
          %s261 = smul.addr %s260, 2
          %s262 = smul.addr %s258, 16
          %s263 = sadd.s32 %s261, %s262
          %s264 = smul.addr %s263, 4
          %s265 = scalar_lea.vmem %s0, %s264
          %s266 = smul.u32 2, %s24
        $region36: #{convnext_layer.3} parent=31 // pred_fallthru
          _
        // Predicated region
        $region37: #{convnext_layer.3} parent=31 // pred_check
          %p267 = pneg %p76
        $region38: #{convnext_layer.3} parent=31 // pred_check_branch
          %269 = sbr.rel (%p267) target = $region40
        $region39: #{convnext_layer.3} parent=31 // pred_region
          %p270 = scmp.lt.s32.totalorder %s23, 1
          %s271 = scalar_select %p270, %s23, 1
          %s272 = smul.addr %s271, 2
          %s273 = scalar_lea.vmem %s1, %s272
        $region40: #{convnext_layer.3} parent=31 // pred_fallthru
          _
        // Predicated region
        $region41: #{convnext_layer.3} parent=31 // pred_check
          %p274 = pneg %p104
        $region42: #{convnext_layer.3} parent=31 // pred_check_branch
          %276 = sbr.rel (%p274) target = $region44
        $region43: #{convnext_layer.3} parent=31 // pred_region
          %s277 = smul.u32 2, %s24
          %p278 = scmp.lt.s32.totalorder %s23, 1
          %s279 = scalar_select %p278, %s23, 1
          %p280 = scmp.lt.s32.totalorder %s277, 7
          %s281 = scalar_select %p280, %s277, 7
          %s282 = smul.addr %s279, 8
          %s283 = sadd.s32 %s281, %s282
          %s284 = smul.addr %s283, 8
          %s285 = scalar_lea.vmem %s2, %s284
          %s286 = smul.u32 2, %s24
        $region44: #{convnext_layer.3} parent=31 // pred_fallthru
          _
      $region32: #{convnext_layer.3} parent=5 // pred_fallthru
        _
      %p287 = scmp.le.s32.totalorder 1, %s16
      %p288 = scmp.lt.s32.totalorder %s16, 9
      %p289 = pnand %p287, %p288
      %p290 = pneg %p289
      // Predicated region
      $region45: #{convnext_layer.3} parent=5 // pred_check
        _
      $region46: #{convnext_layer.3} parent=5 // pred_check_branch
        %292 = sbr.rel (%p289) target = $region48
      $region47: #{convnext_layer.3} parent=5 // pred_region
        %s293 = ssub.s32 %s16, 1
        %s294 = smul.u32 2, %s26
        %p295 = scmp.lt.s32.totalorder %s25, 1
        %s296 = scalar_select %p295, %s25, 1
        %p297 = scmp.lt.s32.totalorder %s294, 7
        %s298 = scalar_select %p297, %s294, 7
        %s299 = smul.addr %s298, 2
        %s300 = smul.addr %s296, 16
        %s301 = sadd.s32 %s299, %s300
        %s302 = smul.addr %s301, 4
        %s303 = scalar_lea.vmem %s0, %s302
        %p304 = pneg %p56
        %p305 = pneg %p53
        %p306 = scmp.lt.s32.totalorder %s25, 1
        %s307 = scalar_select %p306, %s25, 1
        %s308 = smul.addr %s307, 2
        %s309 = scalar_lea.vmem %s1, %s308
        %p310 = pneg %p82
        %p311 = pneg %p79
        %s312 = smul.u32 2, %s26
        %p313 = scmp.lt.s32.totalorder %s25, 1
        %s314 = scalar_select %p313, %s25, 1
        %p315 = scmp.lt.s32.totalorder %s312, 7
        %s316 = scalar_select %p315, %s312, 7
        %s317 = smul.addr %s314, 8
        %s318 = sadd.s32 %s316, %s317
        %s319 = smul.addr %s318, 8
        %s320 = scalar_lea.vmem %s2, %s319
        %p321 = pneg %p110
        %p322 = pneg %p107
        %p323 = pneg %p131
        %p324 = pneg %p128
        %p325 = pneg %p152
        %p326 = pneg %p149
        %p327 = pneg %p173
        %p328 = pneg %p170
        %p329 = pneg %p194
        %p330 = pneg %p191
        %p331 = pneg %p222
        %p332 = pneg %p219
        %s333 = sand.u32 %s209, 1
        %s334 = scalar_lea.sflag [#allocation3], %s333
        %s335 = sand.u32 %s209, 1
        %s336 = smul.addr %s335, 16
        %s337 = scalar_lea.vmem [#allocation2], %s336
        %s338 = smul.u32 2, %s26
        %p339 = scmp.lt.s32.totalorder %s25, 1
        %s340 = scalar_select %p339, %s25, 1
        %p341 = scmp.lt.s32.totalorder %s338, 7
        %s342 = scalar_select %p341, %s338, 7
        %s343 = smul.addr %s342, 2
        %s344 = smul.addr %s340, 16
        %s345 = sadd.s32 %s343, %s344
        %s346 = smul.addr %s345, 4
        %s347 = scalar_lea.vmem %s0, %s346
        %s348 = smul.u32 2, %s26
        %p349 = scmp.lt.s32.totalorder %s25, 1
        %s350 = scalar_select %p349, %s25, 1
        %s351 = smul.addr %s350, 2
        %s352 = scalar_lea.vmem %s1, %s351
        %s353 = smul.u32 2, %s26
        %p354 = scmp.lt.s32.totalorder %s25, 1
        %s355 = scalar_select %p354, %s25, 1
        %p356 = scmp.lt.s32.totalorder %s353, 7
        %s357 = scalar_select %p356, %s353, 7
        %s358 = smul.addr %s355, 8
        %s359 = sadd.s32 %s357, %s358
        %s360 = smul.addr %s359, 8
        %s361 = scalar_lea.vmem %s2, %s360
        %s362 = smul.u32 2, %s26
        %s363 = smul.u32 2, %s26
        %v364 = vld [vmem:[%s352] sm:$0x3]
        %v365 = vrsqrt.pop %v364
        %v366 = vmul.f32 %v365, %v364
        %v367 = vmul.f32 %v366, %v365
        %v368 = vmul.f32 0.5, %v367
        %v369 = vsub.f32 1.5, %v368
        %v370 = vmul.f32 %v365, %v369
        %v371 = vmul.f32 %v364, %v370
        %vm372 = vcmp.eq.f32.partialorder %v364, inf
        %v373 = vsel %vm372, %v364, %v371
        %vm374 = vcmp.eq.f32.partialorder %v364, 0.0
        %v375 = vand.u32 %v364, 2147483648
        %v376 = vsel %vm374, %v375, %v373
        %v378 = vperm.slane %v376, 0
        %v379 = vperm.slane %v376, 1
        %vm382 = vcmask 1040384
        %v383 = vsel %vm382, %v378, 0.0
        %v384 = vsel %vm382, %v379, 0.0
        %v385 = vadd.f32 %v383, %v384
        %386 = vadd.xlane.f32.xlu0 %v385
        %v387 = vpop.xlane.xlu0 %386
        %v388 = vrcp.pop 256.0
        %v389 = vmul.f32 256.0, %v388
        %v390 = vsub.f32 1.0, %v389
        %v391 = vmul.f32 %v388, %v390
        %v392 = vadd.f32 %v388, %v391
        %vm393 = vweird.f32 %v388
        %v394 = vsel %vm393, %v388, %v392
        %v395 = vmul.f32 %v387, %v394
        %v396 = vrcp.pop %v395
        %v398 = vperm.slane %v396, 0
        %v400 = vmul.f32 %v376, %v398
        %v401 = vld [vmem:[%s347] sm:$0xff]
        %v402 = vld [vmem:[%s347 + $0x8] sm:$0xff]
        %v403 = vunpack.c.l.bf16 %v401
        %v404 = vunpack.c.h.bf16 %v401
        %v405 = vunpack.c.l.bf16 %v402
        %v406 = vunpack.c.h.bf16 %v402
        %v407 = vld [vmem:[%s3] sm:$0x3]
        %v409 = vperm.slane %v400, 0
        %v410 = vperm.slane %v400, 1
        %v413 = vmul.f32 %v409, %v403
        %v414 = vmul.f32 %v410, %v404
        %v415 = vmul.f32 %v409, %v405
        %v416 = vmul.f32 %v410, %v406
        %v418 = vperm.slane %v407, 0
        %v419 = vperm.slane %v407, 1
        %v422 = vmul.f32 %v418, %v413
        %v423 = vmul.f32 %v419, %v414
        %v424 = vmul.f32 %v418, %v415
        %v425 = vmul.f32 %v419, %v416
        %v426 = vld [vmem:[%s4] sm:$0x3]
        %v428 = vperm.slane %v426, 0
        %v429 = vperm.slane %v426, 1
        %v432 = vadd.f32 %v422, %v428
        %v433 = vadd.f32 %v423, %v429
        %v434 = vadd.f32 %v424, %v428
        %v435 = vadd.f32 %v425, %v429
        %v436 = vadd.f32 %v432, %v403
        %v437 = vadd.f32 %v433, %v404
        %v438 = vadd.f32 %v434, %v405
        %v439 = vadd.f32 %v435, %v406
        %v440 = vpack.c.bf16 %v438, %v436
        %v441 = vpack.c.bf16 %v439, %v437
        %v442 = vld [vmem:[%s5] sm:$0xf]
        %v443 = vld [vmem:[%s5 + $0x4] sm:$0xf]
        %v444 = vld [vmem:[%s5 + $0x8] sm:$0xf]
        %v445 = vld [vmem:[%s5 + $0xc] sm:$0xf]
        %v446 = vld [vmem:[%s5 + $0x10] sm:$0xf]
        %v447 = vld [vmem:[%s5 + $0x14] sm:$0xf]
        %v448 = vld [vmem:[%s5 + $0x18] sm:$0xf]
        %v449 = vld [vmem:[%s5 + $0x1c] sm:$0xf]
        %v450 = vld [vmem:[%s5 + $0x20] sm:$0xf]
        %v451 = vld [vmem:[%s5 + $0x24] sm:$0xf]
        %v452 = vld [vmem:[%s5 + $0x28] sm:$0xf]
        %v453 = vld [vmem:[%s5 + $0x2c] sm:$0xf]
        %v454 = vld [vmem:[%s5 + $0x30] sm:$0xf]
        %v455 = vld [vmem:[%s5 + $0x34] sm:$0xf]
        %v456 = vld [vmem:[%s5 + $0x38] sm:$0xf]
        %v457 = vld [vmem:[%s5 + $0x3c] sm:$0xf]
        %v458 = vld [vmem:[%s5 + $0x40] sm:$0xf]
        %v459 = vld [vmem:[%s5 + $0x44] sm:$0xf]
        %v460 = vld [vmem:[%s5 + $0x48] sm:$0xf]
        %v461 = vld [vmem:[%s5 + $0x4c] sm:$0xf]
        %v462 = vld [vmem:[%s5 + $0x50] sm:$0xf]
        %v463 = vld [vmem:[%s5 + $0x54] sm:$0xf]
        %v464 = vld [vmem:[%s5 + $0x58] sm:$0xf]
        %v465 = vld [vmem:[%s5 + $0x5c] sm:$0xf]
        %v466 = vld [vmem:[%s5 + $0x60] sm:$0xf]
        %v467 = vld [vmem:[%s5 + $0x64] sm:$0xf]
        %v468 = vld [vmem:[%s5 + $0x68] sm:$0xf]
        %v469 = vld [vmem:[%s5 + $0x6c] sm:$0xf]
        %v470 = vld [vmem:[%s5 + $0x70] sm:$0xf]
        %v471 = vld [vmem:[%s5 + $0x74] sm:$0xf]
        %v472 = vld [vmem:[%s5 + $0x78] sm:$0xf]
        %v473 = vld [vmem:[%s5 + $0x7c] sm:$0xf]
        %v474 = vld [vmem:[%s6] sm:$0x1]
        %v476 = vperm.slane %v474, 0
        %v510 = vunpack.c.l.b16 %v442
        %v511 = vunpack.c.l.b16 %v443
        %v512 = vunpack.c.l.b16 %v444
        %v513 = vunpack.c.l.b16 %v445
        %v514 = vunpack.c.l.b16 %v446
        %v515 = vunpack.c.l.b16 %v447
        %v516 = vunpack.c.l.b16 %v448
        %v517 = vunpack.c.l.b16 %v449
        %v518 = vunpack.c.l.b16 %v450
        %v519 = vunpack.c.l.b16 %v451
        %v520 = vunpack.c.l.b16 %v452
        %v521 = vunpack.c.l.b16 %v453
        %v522 = vunpack.c.l.b16 %v454
        %v523 = vunpack.c.l.b16 %v455
        %v524 = vunpack.c.l.b16 %v456
        %v525 = vunpack.c.l.b16 %v457
        %v526 = vunpack.c.l.b16 %v458
        %v527 = vunpack.c.l.b16 %v459
        %v528 = vunpack.c.l.b16 %v460
        %v529 = vunpack.c.l.b16 %v461
        %v530 = vunpack.c.l.b16 %v462
        %v531 = vunpack.c.l.b16 %v463
        %v532 = vunpack.c.l.b16 %v464
        %v533 = vunpack.c.l.b16 %v465
        %v534 = vunpack.c.l.b16 %v466
        %v535 = vunpack.c.l.b16 %v467
        %v536 = vunpack.c.l.b16 %v468
        %v537 = vunpack.c.l.b16 %v469
        %v538 = vunpack.c.l.b16 %v470
        %v539 = vunpack.c.l.b16 %v471
        %v540 = vunpack.c.l.b16 %v472
        %v541 = vunpack.c.l.b16 %v473
        %v542 = vpack.c.b16 %v511, %v510
        %v543 = vpack.c.b16 %v513, %v512
        %v544 = vpack.c.b16 %v515, %v514
        %v545 = vpack.c.b16 %v517, %v516
        %v546 = vpack.c.b16 %v519, %v518
        %v547 = vpack.c.b16 %v521, %v520
        %v548 = vpack.c.b16 %v523, %v522
        %v549 = vpack.c.b16 %v525, %v524
        %v550 = vpack.c.b16 %v527, %v526
        %v551 = vpack.c.b16 %v529, %v528
        %v552 = vpack.c.b16 %v531, %v530
        %v553 = vpack.c.b16 %v533, %v532
        %v554 = vpack.c.b16 %v535, %v534
        %v555 = vpack.c.b16 %v537, %v536
        %v556 = vpack.c.b16 %v539, %v538
        %v557 = vpack.c.b16 %v541, %v540
        %574 = vmatpush.bf16.msra.mxu0 %v549
        %575 = vmatpush.bf16.msra.mxu0 %v548
        %576 = vmatpush.bf16.msra.mxu0 %v547
        %577 = vmatpush.bf16.msra.mxu0 %v546
        %578 = vmatpush.bf16.msra.mxu0 %v545
        %579 = vmatpush.bf16.msra.mxu0 %v544
        %580 = vmatpush.bf16.msra.mxu0 %v543
        %581 = vmatpush.bf16.msra.mxu0 %v542
        %582 = vmatmul.bf16.gmra.mxu0 %v440
        %v583 = vpop.f32.mrf.mxu0
        %v584 = vadd.f32 %v476, %v583
        %v585 = vpop.f32.mrf.mxu0
        %v586 = vadd.f32 %v476, %v585
        %587 = vdwg.mxu0
        %588 = vmatpush.bf16.msra.mxu0 %v557
        %589 = vmatpush.bf16.msra.mxu0 %v556
        %590 = vmatpush.bf16.msra.mxu0 %v555
        %591 = vmatpush.bf16.msra.mxu0 %v554
        %592 = vmatpush.bf16.msra.mxu0 %v553
        %593 = vmatpush.bf16.msra.mxu0 %v552
        %594 = vmatpush.bf16.msra.mxu0 %v551
        %595 = vmatpush.bf16.msra.mxu0 %v550
        %596 = vmatmul.bf16.gmra.mxu0 %v441
        %v597 = vpop.f32.mrf.mxu0
        %v598 = vadd.f32 %v584, %v597
        %v599 = vpop.f32.mrf.mxu0
        %v600 = vadd.f32 %v586, %v599
        %601 = vdwg.mxu0
        %v602 = vld [vmem:[%s361] sm:$0xff]
        %v603 = vld [vmem:[%s361 + $0x8] sm:$0xff]
        %v604 = vadd.f32 %v602, %v598
        %v605 = vadd.f32 %v603, %v600
        %606 = vst [vmem:[%s337] sm:$0xff] %v604
        %607 = vst [vmem:[%s337 + $0x8] sm:$0xff] %v605
        %s608 = sand.u32 %s209, 1
        %s609 = scalar_lea.sflag [#allocation3], %s608
        %s610 = sand.u32 %s209, 1
        %s611 = smul.addr %s610, 16
        %s612 = scalar_lea.vmem [#allocation2], %s611
        // Predicated region
        $region49: #{convnext_layer.3} parent=47 // pred_check
          %p613 = pneg %p219
        $region50: #{convnext_layer.3} parent=47 // pred_check_branch
          %615 = sbr.rel (%p613) target = $region52
        $region51: #{convnext_layer.3} parent=47 // pred_region
          %s616 = smul.u32 2, %s26
          %618 = vsyncadd %s609, 0
          %s619 = smul.addr %s25, 8
          %s620 = sadd.s32 %s616, %s619
          %s621 = smul.addr %s620, 8
          %s622 = scalar_lea.hbm %s7, %s621
          %s623 = sshll.u32 %s612, 4
          %s624 = int_to_ptr.vmem [resolvable:$true] %s623
          %s625 = sshll.u32 %s622, 4
          %s626 = int_to_ptr.hbm [resolvable:$true] %s625
          %631 = dma.vmem_to_hbm [thread:$0]  %s624, 256, %s626, %s609, 128, 128, 8
        $region52: #{convnext_layer.3} parent=47 // pred_fallthru
          _
      $region48: #{convnext_layer.3} parent=5 // pred_fallthru
        _
      %p632 = scmp.le.s32.totalorder 2, %s16
      // Predicated region
      $region53: #{convnext_layer.3} parent=5 // pred_check
        %p633 = pneg %p632
      $region54: #{convnext_layer.3} parent=5 // pred_check_branch
        %635 = sbr.rel (%p633) target = $region56
      $region55: #{convnext_layer.3} parent=5 // pred_region
        %s636 = ssub.s32 %s16, 2
        // Predicated region
        $region57: #{convnext_layer.3} parent=55 // pred_check
          %p637 = pneg %p225
        $region58: #{convnext_layer.3} parent=55 // pred_check_branch
          %639 = sbr.rel (%p637) target = $region60
        $region59: #{convnext_layer.3} parent=55 // pred_region
          %s640 = sand.u32 %s210, 1
          %s641 = scalar_lea.sflag [#allocation3], %s640
          %s642 = sand.u32 %s210, 1
          %s643 = smul.addr %s642, 16
          %s644 = scalar_lea.vmem [#allocation2], %s643
          %646 = dma.done %s641, 256
        $region60: #{convnext_layer.3} parent=55 // pred_fallthru
          _
      $region56: #{convnext_layer.3} parent=5 // pred_fallthru
        _
    $region6: #{convnext_layer.3} parent=1 // loop_footer
      %s20 = sadd.s32 1, %s16
    $region7: #{convnext_layer.3} parent=1 // loop_footer_branch
      %15 = sbr.rel target = $region3
    $region8: #{convnext_layer.3} parent=1 // loop_exit
      _
    %647 = vsyncpa [#allocation3], 1
    %s648 = scalar_lea.sflag [#allocation3], 1
    %649 = vsyncpa %s648, 1

// kernel: convnext_layer.2
$region0: #{convnext_layer.2}
  #allocation0 [shape = 'u32[]', space=smem, size = 0x4, offset = 0x4, fixed_abs, tag = 'smem constant byte address 0x4 - core index']
  #allocation1 [shape = 'u32[72,128]{1,0:T(1,128)}', space=vmem, size = 0x9000, scoped, tag = 'internal scratch']
  %s0 = inlined_call_operand.vmem [shape: f32[2,64,128], index: 0, kind: input, shape index: {}]
  %s1 = inlined_call_operand.vmem [shape: f32[2,4,8,128], index: 1, kind: input, shape index: {}]
  %s2 = inlined_call_operand.vmem [shape: f32[2,4,8,128], index: 2, kind: input, shape index: {}]
  %s3 = inlined_call_operand.vmem [shape: f32[7,128], index: 3, kind: input, shape index: {}]
  %s4 = inlined_call_operand.vmem [shape: f32[1,128], index: 4, kind: input, shape index: {}]
  %s5 = inlined_call_operand.vmem [shape: f32[1,128], index: 5, kind: input, shape index: {}]
  %s6 = inlined_call_operand.vmem [shape: f32[1,128], index: 6, kind: input, shape index: {}]
  %s7 = inlined_call_operand.vmem [shape: bf16[128,256], index: 7, kind: input, shape index: {}]
  %s8 = inlined_call_operand.vmem [shape: f32[1,256], index: 8, kind: input, shape index: {}]
  %s9 = inlined_call_operand.vmem [shape: bf16[2,64,256], index: 9, kind: output, shape index: {0}]
  %s10 = inlined_call_operand.vmem [shape: f32[2,32,256], index: 10, kind: output, shape index: {1}]
  %11 = xla_tuple %s9, %s10
  %s12 = sld [smem:[#allocation0]]
  $region77: #{convnext_layer.2} parent=0
    _
  %s14 = ssub.s32 1, %s12
  %s15 = scalar_select 0, %s14, %s12
  loop: start=0, step=1, limit=10
  $region2: #{convnext_layer.2} parent=0 // loop_pre_header
    _
  $region3: #{convnext_layer.2} parent=0 // loop_header
    %s17 = sphi 0, %s21
    %p18 = scmp.ge.s32.totalorder %s17, 10
    %s24 = sphi 0, %s36
    %s25 = sphi 0, %s32
    %s26 = sphi 0, %s24
    %s27 = sphi 0, %s25
    %s28 = sphi 0, %s26
    %s29 = sphi 0, %s27
    %s41 = sphi 0, %s43
    %s44 = sphi 0, %s41
    %s45 = sphi 0, %s44
    %s61 = sphi 0, %s45
    %s69 = sphi 0, %s71
    %s72 = sphi 0, %s69
    %s73 = sphi 0, %s72
    %s89 = sphi 0, %s73
    %s97 = sphi 0, %s99
    %s100 = sphi 0, %s97
    %s101 = sphi 0, %s100
    %s117 = sphi 0, %s101
    %s121 = sphi 0, %s121
    %s123 = sphi 0, %s121
    %s124 = sphi 0, %s123
    %s138 = sphi 0, %s124
    %s142 = sphi 0, %s142
    %s144 = sphi 0, %s142
    %s145 = sphi 0, %s144
    %s159 = sphi 0, %s145
    %s163 = sphi 0, %s163
    %s165 = sphi 0, %s163
    %s166 = sphi 0, %s165
    %s180 = sphi 0, %s166
    %s184 = sphi 0, %s184
    %s186 = sphi 0, %s184
    %s187 = sphi 0, %s186
    %s201 = sphi 0, %s187
    %s205 = sphi 0, %s205
    %s207 = sphi 0, %s205
    %s208 = sphi 0, %s207
    %s222 = sphi 0, %s208
    %s226 = sphi 0, %s226
    %s228 = sphi 0, %s226
    %s229 = sphi 0, %s228
    %s243 = sphi 0, %s229
    %s251 = sphi 0, %s253
    %s254 = sphi 0, %s251
    %s255 = sphi 0, %s254
    %s271 = sphi 0, %s255
    %s279 = sphi 0, %s281
    %s282 = sphi 0, %s279
    %s283 = sphi 0, %s282
    %s299 = sphi 0, %s283
  $region4: #{convnext_layer.2} parent=0 // loop_header_branch
    %20 = sbr.rel (%p18) target = $region8
  $region5: #{convnext_layer.2} parent=0 // loop_body
    %s22 = ssub.s32 %s17, 1
    %s23 = ssub.s32 %s17, 2
    %s30 = sadd.s32 1, %s25
    %p31 = scmp.ge.s32.totalorder %s30, 4
    %s32 = scalar_select %p31, 0, %s30
    %s33 = sadd.s32 1, %s24
    %s34 = scalar_select %p31, %s33, %s24
    %p35 = scmp.ge.s32.totalorder %s34, 2
    %s36 = scalar_select %p35, 0, %s34
    %s37 = ssub.s32 %s24, %s36
    %s38 = ssub.s32 %s25, %s32
    %s39 = sor.u32 %s37, %s38
    %p40 = scmp.eq.s32.totalorder %s39, 0
    %s42 = sadd.s32 %s41, 1
    %s43 = scalar_select %p40, %s41, %s42
    %p46 = pneg %p40
    %p47 = scmp.eq.s32.totalorder %s17, 7
    %p48 = por %p46, %p47
    %p49 = scmp.ne.s32.totalorder %s41, %s44
    %p50 = scmp.eq.s32.totalorder %s17, 0
    %p51 = por %p49, %p50
    %p52 = scmp.ne.s32.totalorder %s41, %s44
    %p53 = scmp.eq.s32.totalorder %s22, 7
    %p54 = por %p52, %p53
    %p55 = scmp.ne.s32.totalorder %s44, %s45
    %p56 = scmp.eq.s32.totalorder %s22, 0
    %p57 = por %p55, %p56
    %p58 = scmp.ne.s32.totalorder %s44, %s45
    %p59 = scmp.eq.s32.totalorder %s23, 7
    %p60 = por %p58, %p59
    %p62 = scmp.ne.s32.totalorder %s45, %s61
    %p63 = scmp.eq.s32.totalorder %s23, 0
    %p64 = por %p62, %p63
    %s65 = ssub.s32 %s24, %s36
    %s66 = ssub.s32 %s25, %s32
    %s67 = sor.u32 %s65, %s66
    %p68 = scmp.eq.s32.totalorder %s67, 0
    %s70 = sadd.s32 %s69, 1
    %s71 = scalar_select %p68, %s69, %s70
    %p74 = pneg %p68
    %p75 = scmp.eq.s32.totalorder %s17, 7
    %p76 = por %p74, %p75
    %p77 = scmp.ne.s32.totalorder %s69, %s72
    %p78 = scmp.eq.s32.totalorder %s17, 0
    %p79 = por %p77, %p78
    %p80 = scmp.ne.s32.totalorder %s69, %s72
    %p81 = scmp.eq.s32.totalorder %s22, 7
    %p82 = por %p80, %p81
    %p83 = scmp.ne.s32.totalorder %s72, %s73
    %p84 = scmp.eq.s32.totalorder %s22, 0
    %p85 = por %p83, %p84
    %p86 = scmp.ne.s32.totalorder %s72, %s73
    %p87 = scmp.eq.s32.totalorder %s23, 7
    %p88 = por %p86, %p87
    %p90 = scmp.ne.s32.totalorder %s73, %s89
    %p91 = scmp.eq.s32.totalorder %s23, 0
    %p92 = por %p90, %p91
    %s93 = ssub.s32 %s24, %s36
    %s94 = ssub.s32 %s25, %s32
    %s95 = sor.u32 %s93, %s94
    %p96 = scmp.eq.s32.totalorder %s95, 0
    %s98 = sadd.s32 %s97, 1
    %s99 = scalar_select %p96, %s97, %s98
    %p102 = pneg %p96
    %p103 = scmp.eq.s32.totalorder %s17, 7
    %p104 = por %p102, %p103
    %p105 = scmp.ne.s32.totalorder %s97, %s100
    %p106 = scmp.eq.s32.totalorder %s17, 0
    %p107 = por %p105, %p106
    %p108 = scmp.ne.s32.totalorder %s97, %s100
    %p109 = scmp.eq.s32.totalorder %s22, 7
    %p110 = por %p108, %p109
    %p111 = scmp.ne.s32.totalorder %s100, %s101
    %p112 = scmp.eq.s32.totalorder %s22, 0
    %p113 = por %p111, %p112
    %p114 = scmp.ne.s32.totalorder %s100, %s101
    %p115 = scmp.eq.s32.totalorder %s23, 7
    %p116 = por %p114, %p115
    %p118 = scmp.ne.s32.totalorder %s101, %s117
    %p119 = scmp.eq.s32.totalorder %s23, 0
    %p120 = por %p118, %p119
    %s122 = sadd.s32 %s121, 1
    %p125 = scmp.eq.s32.totalorder %s17, 7
    %p126 = scmp.ne.s32.totalorder %s121, %s123
    %p127 = scmp.eq.s32.totalorder %s17, 0
    %p128 = por %p126, %p127
    %p129 = scmp.ne.s32.totalorder %s121, %s123
    %p130 = scmp.eq.s32.totalorder %s22, 7
    %p131 = por %p129, %p130
    %p132 = scmp.ne.s32.totalorder %s123, %s124
    %p133 = scmp.eq.s32.totalorder %s22, 0
    %p134 = por %p132, %p133
    %p135 = scmp.ne.s32.totalorder %s123, %s124
    %p136 = scmp.eq.s32.totalorder %s23, 7
    %p137 = por %p135, %p136
    %p139 = scmp.ne.s32.totalorder %s124, %s138
    %p140 = scmp.eq.s32.totalorder %s23, 0
    %p141 = por %p139, %p140
    %s143 = sadd.s32 %s142, 1
    %p146 = scmp.eq.s32.totalorder %s17, 7
    %p147 = scmp.ne.s32.totalorder %s142, %s144
    %p148 = scmp.eq.s32.totalorder %s17, 0
    %p149 = por %p147, %p148
    %p150 = scmp.ne.s32.totalorder %s142, %s144
    %p151 = scmp.eq.s32.totalorder %s22, 7
    %p152 = por %p150, %p151
    %p153 = scmp.ne.s32.totalorder %s144, %s145
    %p154 = scmp.eq.s32.totalorder %s22, 0
    %p155 = por %p153, %p154
    %p156 = scmp.ne.s32.totalorder %s144, %s145
    %p157 = scmp.eq.s32.totalorder %s23, 7
    %p158 = por %p156, %p157
    %p160 = scmp.ne.s32.totalorder %s145, %s159
    %p161 = scmp.eq.s32.totalorder %s23, 0
    %p162 = por %p160, %p161
    %s164 = sadd.s32 %s163, 1
    %p167 = scmp.eq.s32.totalorder %s17, 7
    %p168 = scmp.ne.s32.totalorder %s163, %s165
    %p169 = scmp.eq.s32.totalorder %s17, 0
    %p170 = por %p168, %p169
    %p171 = scmp.ne.s32.totalorder %s163, %s165
    %p172 = scmp.eq.s32.totalorder %s22, 7
    %p173 = por %p171, %p172
    %p174 = scmp.ne.s32.totalorder %s165, %s166
    %p175 = scmp.eq.s32.totalorder %s22, 0
    %p176 = por %p174, %p175
    %p177 = scmp.ne.s32.totalorder %s165, %s166
    %p178 = scmp.eq.s32.totalorder %s23, 7
    %p179 = por %p177, %p178
    %p181 = scmp.ne.s32.totalorder %s166, %s180
    %p182 = scmp.eq.s32.totalorder %s23, 0
    %p183 = por %p181, %p182
    %s185 = sadd.s32 %s184, 1
    %p188 = scmp.eq.s32.totalorder %s17, 7
    %p189 = scmp.ne.s32.totalorder %s184, %s186
    %p190 = scmp.eq.s32.totalorder %s17, 0
    %p191 = por %p189, %p190
    %p192 = scmp.ne.s32.totalorder %s184, %s186
    %p193 = scmp.eq.s32.totalorder %s22, 7
    %p194 = por %p192, %p193
    %p195 = scmp.ne.s32.totalorder %s186, %s187
    %p196 = scmp.eq.s32.totalorder %s22, 0
    %p197 = por %p195, %p196
    %p198 = scmp.ne.s32.totalorder %s186, %s187
    %p199 = scmp.eq.s32.totalorder %s23, 7
    %p200 = por %p198, %p199
    %p202 = scmp.ne.s32.totalorder %s187, %s201
    %p203 = scmp.eq.s32.totalorder %s23, 0
    %p204 = por %p202, %p203
    %s206 = sadd.s32 %s205, 1
    %p209 = scmp.eq.s32.totalorder %s17, 7
    %p210 = scmp.ne.s32.totalorder %s205, %s207
    %p211 = scmp.eq.s32.totalorder %s17, 0
    %p212 = por %p210, %p211
    %p213 = scmp.ne.s32.totalorder %s205, %s207
    %p214 = scmp.eq.s32.totalorder %s22, 7
    %p215 = por %p213, %p214
    %p216 = scmp.ne.s32.totalorder %s207, %s208
    %p217 = scmp.eq.s32.totalorder %s22, 0
    %p218 = por %p216, %p217
    %p219 = scmp.ne.s32.totalorder %s207, %s208
    %p220 = scmp.eq.s32.totalorder %s23, 7
    %p221 = por %p219, %p220
    %p223 = scmp.ne.s32.totalorder %s208, %s222
    %p224 = scmp.eq.s32.totalorder %s23, 0
    %p225 = por %p223, %p224
    %s227 = sadd.s32 %s226, 1
    %p230 = scmp.eq.s32.totalorder %s17, 7
    %p231 = scmp.ne.s32.totalorder %s226, %s228
    %p232 = scmp.eq.s32.totalorder %s17, 0
    %p233 = por %p231, %p232
    %p234 = scmp.ne.s32.totalorder %s226, %s228
    %p235 = scmp.eq.s32.totalorder %s22, 7
    %p236 = por %p234, %p235
    %p237 = scmp.ne.s32.totalorder %s228, %s229
    %p238 = scmp.eq.s32.totalorder %s22, 0
    %p239 = por %p237, %p238
    %p240 = scmp.ne.s32.totalorder %s228, %s229
    %p241 = scmp.eq.s32.totalorder %s23, 7
    %p242 = por %p240, %p241
    %p244 = scmp.ne.s32.totalorder %s229, %s243
    %p245 = scmp.eq.s32.totalorder %s23, 0
    %p246 = por %p244, %p245
    %s247 = ssub.s32 %s24, %s36
    %s248 = ssub.s32 %s25, %s32
    %s249 = sor.u32 %s247, %s248
    %p250 = scmp.eq.s32.totalorder %s249, 0
    %s252 = sadd.s32 %s251, 1
    %s253 = scalar_select %p250, %s251, %s252
    %p256 = pneg %p250
    %p257 = scmp.eq.s32.totalorder %s17, 7
    %p258 = por %p256, %p257
    %p259 = scmp.ne.s32.totalorder %s251, %s254
    %p260 = scmp.eq.s32.totalorder %s17, 0
    %p261 = por %p259, %p260
    %p262 = scmp.ne.s32.totalorder %s251, %s254
    %p263 = scmp.eq.s32.totalorder %s22, 7
    %p264 = por %p262, %p263
    %p265 = scmp.ne.s32.totalorder %s254, %s255
    %p266 = scmp.eq.s32.totalorder %s22, 0
    %p267 = por %p265, %p266
    %p268 = scmp.ne.s32.totalorder %s254, %s255
    %p269 = scmp.eq.s32.totalorder %s23, 7
    %p270 = por %p268, %p269
    %p272 = scmp.ne.s32.totalorder %s255, %s271
    %p273 = scmp.eq.s32.totalorder %s23, 0
    %p274 = por %p272, %p273
    %s275 = ssub.s32 %s24, %s36
    %s276 = ssub.s32 %s25, %s32
    %s277 = sor.u32 %s275, %s276
    %p278 = scmp.eq.s32.totalorder %s277, 0
    %s280 = sadd.s32 %s279, 1
    %s281 = scalar_select %p278, %s279, %s280
    %p284 = pneg %p278
    %p285 = scmp.eq.s32.totalorder %s17, 7
    %p286 = por %p284, %p285
    %p287 = scmp.ne.s32.totalorder %s279, %s282
    %p288 = scmp.eq.s32.totalorder %s17, 0
    %p289 = por %p287, %p288
    %p290 = scmp.ne.s32.totalorder %s279, %s282
    %p291 = scmp.eq.s32.totalorder %s22, 7
    %p292 = por %p290, %p291
    %p293 = scmp.ne.s32.totalorder %s282, %s283
    %p294 = scmp.eq.s32.totalorder %s22, 0
    %p295 = por %p293, %p294
    %p296 = scmp.ne.s32.totalorder %s282, %s283
    %p297 = scmp.eq.s32.totalorder %s23, 7
    %p298 = por %p296, %p297
    %p300 = scmp.ne.s32.totalorder %s283, %s299
    %p301 = scmp.eq.s32.totalorder %s23, 0
    %p302 = por %p300, %p301
    %p303 = scmp.le.s32.totalorder 1, %s17
    %p304 = scmp.lt.s32.totalorder %s17, 9
    %p305 = pnand %p303, %p304
    %p306 = pneg %p305
    // Predicated region
    $region9: #{convnext_layer.2} parent=5 // pred_check
      _
    $region10: #{convnext_layer.2} parent=5 // pred_check_branch
      %308 = sbr.rel (%p305) target = $region12
    $region11: #{convnext_layer.2} parent=5 // pred_region
      %s309 = ssub.s32 %s17, 1
      // Predicated region
      $region13: #{convnext_layer.2} parent=11 // pred_check
        %p310 = pneg %p134
      $region14: #{convnext_layer.2} parent=11 // pred_check_branch
        %312 = sbr.rel (%p310) target = $region16
      $region15: #{convnext_layer.2} parent=11 // pred_region
        _
      $region16: #{convnext_layer.2} parent=11 // pred_fallthru
        _
      // Predicated region
      $region17: #{convnext_layer.2} parent=11 // pred_check
        %p313 = pneg %p155
      $region18: #{convnext_layer.2} parent=11 // pred_check_branch
        %315 = sbr.rel (%p313) target = $region20
      $region19: #{convnext_layer.2} parent=11 // pred_region
        _
      $region20: #{convnext_layer.2} parent=11 // pred_fallthru
        _
      // Predicated region
      $region21: #{convnext_layer.2} parent=11 // pred_check
        %p316 = pneg %p176
      $region22: #{convnext_layer.2} parent=11 // pred_check_branch
        %318 = sbr.rel (%p316) target = $region24
      $region23: #{convnext_layer.2} parent=11 // pred_region
        _
      $region24: #{convnext_layer.2} parent=11 // pred_fallthru
        _
      // Predicated region
      $region25: #{convnext_layer.2} parent=11 // pred_check
        %p319 = pneg %p197
      $region26: #{convnext_layer.2} parent=11 // pred_check_branch
        %321 = sbr.rel (%p319) target = $region28
      $region27: #{convnext_layer.2} parent=11 // pred_region
        _
      $region28: #{convnext_layer.2} parent=11 // pred_fallthru
        _
      // Predicated region
      $region29: #{convnext_layer.2} parent=11 // pred_check
        %p322 = pneg %p218
      $region30: #{convnext_layer.2} parent=11 // pred_check_branch
        %324 = sbr.rel (%p322) target = $region32
      $region31: #{convnext_layer.2} parent=11 // pred_region
        _
      $region32: #{convnext_layer.2} parent=11 // pred_fallthru
        _
      // Predicated region
      $region33: #{convnext_layer.2} parent=11 // pred_check
        %p325 = pneg %p239
      $region34: #{convnext_layer.2} parent=11 // pred_check_branch
        %327 = sbr.rel (%p325) target = $region36
      $region35: #{convnext_layer.2} parent=11 // pred_region
        _
      $region36: #{convnext_layer.2} parent=11 // pred_fallthru
        _
    $region12: #{convnext_layer.2} parent=5 // pred_fallthru
      _
    %p328 = scmp.lt.s32.totalorder %s17, 8
    // Predicated region
    $region37: #{convnext_layer.2} parent=5 // pred_check
      %p329 = pneg %p328
    $region38: #{convnext_layer.2} parent=5 // pred_check_branch
      %331 = sbr.rel (%p329) target = $region40
    $region39: #{convnext_layer.2} parent=5 // pred_region
      // Predicated region
      $region41: #{convnext_layer.2} parent=39 // pred_check
        %p332 = pneg %p51
      $region42: #{convnext_layer.2} parent=39 // pred_check_branch
        %334 = sbr.rel (%p332) target = $region44
      $region43: #{convnext_layer.2} parent=39 // pred_region
        %s335 = smul.u32 2, %s25
        %p336 = scmp.lt.s32.totalorder %s24, 1
        %s337 = scalar_select %p336, %s24, 1
        %p338 = scmp.lt.s32.totalorder %s335, 7
        %s339 = scalar_select %p338, %s335, 7
        %s340 = smul.addr %s337, 8
        %s341 = sadd.s32 %s339, %s340
        %s342 = smul.addr %s341, 8
        %s343 = scalar_lea.vmem %s0, %s342
        %s344 = smul.u32 2, %s25
      $region44: #{convnext_layer.2} parent=39 // pred_fallthru
        _
      // Predicated region
      $region45: #{convnext_layer.2} parent=39 // pred_check
        %p345 = pneg %p79
      $region46: #{convnext_layer.2} parent=39 // pred_check_branch
        %347 = sbr.rel (%p345) target = $region48
      $region47: #{convnext_layer.2} parent=39 // pred_region
        %p348 = scmp.lt.s32.totalorder %s24, 1
        %s349 = scalar_select %p348, %s24, 1
        %p350 = scmp.lt.s32.totalorder %s25, 3
        %s351 = scalar_select %p350, %s25, 3
        %s352 = smul.addr %s349, 4
        %s353 = sadd.s32 %s351, %s352
        %s354 = smul.addr %s353, 8
        %s355 = scalar_lea.vmem %s1, %s354
      $region48: #{convnext_layer.2} parent=39 // pred_fallthru
        _
      // Predicated region
      $region49: #{convnext_layer.2} parent=39 // pred_check
        %p356 = pneg %p107
      $region50: #{convnext_layer.2} parent=39 // pred_check_branch
        %358 = sbr.rel (%p356) target = $region52
      $region51: #{convnext_layer.2} parent=39 // pred_region
        %p359 = scmp.lt.s32.totalorder %s24, 1
        %s360 = scalar_select %p359, %s24, 1
        %p361 = scmp.lt.s32.totalorder %s25, 3
        %s362 = scalar_select %p361, %s25, 3
        %s363 = smul.addr %s360, 4
        %s364 = sadd.s32 %s362, %s363
        %s365 = smul.addr %s364, 8
        %s366 = scalar_lea.vmem %s2, %s365
      $region52: #{convnext_layer.2} parent=39 // pred_fallthru
        _
    $region40: #{convnext_layer.2} parent=5 // pred_fallthru
      _
    %p367 = scmp.le.s32.totalorder 1, %s17
    %p368 = scmp.lt.s32.totalorder %s17, 9
    %p369 = pnand %p367, %p368
    %p370 = pneg %p369
    // Predicated region
    $region53: #{convnext_layer.2} parent=5 // pred_check
      _
    $region54: #{convnext_layer.2} parent=5 // pred_check_branch
      %372 = sbr.rel (%p369) target = $region56
    $region55: #{convnext_layer.2} parent=5 // pred_region
      %s373 = ssub.s32 %s17, 1
      %s374 = smul.u32 2, %s27
      %p375 = scmp.lt.s32.totalorder %s26, 1
      %s376 = scalar_select %p375, %s26, 1
      %p377 = scmp.lt.s32.totalorder %s374, 7
      %s378 = scalar_select %p377, %s374, 7
      %s379 = smul.addr %s376, 8
      %s380 = sadd.s32 %s378, %s379
      %s381 = smul.addr %s380, 8
      %s382 = scalar_lea.vmem %s0, %s381
      %p383 = pneg %p57
      %p384 = pneg %p54
      %p385 = scmp.lt.s32.totalorder %s26, 1
      %s386 = scalar_select %p385, %s26, 1
      %p387 = scmp.lt.s32.totalorder %s27, 3
      %s388 = scalar_select %p387, %s27, 3
      %s389 = smul.addr %s386, 4
      %s390 = sadd.s32 %s388, %s389
      %s391 = smul.addr %s390, 8
      %s392 = scalar_lea.vmem %s1, %s391
      %p393 = pneg %p85
      %p394 = pneg %p82
      %p395 = scmp.lt.s32.totalorder %s26, 1
      %s396 = scalar_select %p395, %s26, 1
      %p397 = scmp.lt.s32.totalorder %s27, 3
      %s398 = scalar_select %p397, %s27, 3
      %s399 = smul.addr %s396, 4
      %s400 = sadd.s32 %s398, %s399
      %s401 = smul.addr %s400, 8
      %s402 = scalar_lea.vmem %s2, %s401
      %p403 = pneg %p113
      %p404 = pneg %p110
      %p405 = pneg %p134
      %p406 = pneg %p131
      %p407 = pneg %p155
      %p408 = pneg %p152
      %p409 = pneg %p176
      %p410 = pneg %p173
      %p411 = pneg %p197
      %p412 = pneg %p194
      %p413 = pneg %p218
      %p414 = pneg %p215
      %p415 = pneg %p239
      %p416 = pneg %p236
      %p417 = pneg %p267
      %p418 = pneg %p264
      %s419 = smul.u32 2, %s27
      %p420 = scmp.lt.s32.totalorder %s26, 1
      %s421 = scalar_select %p420, %s26, 1
      %p422 = scmp.lt.s32.totalorder %s419, 7
      %s423 = scalar_select %p422, %s419, 7
      %s424 = smul.addr %s423, 2
      %s425 = smul.addr %s421, 16
      %s426 = sadd.s32 %s424, %s425
      %s427 = smul.addr %s426, 4
      %s428 = scalar_lea.vmem %s9, %s427
      %p429 = pneg %p295
      %p430 = pneg %p292
      %p431 = scmp.lt.s32.totalorder %s26, 1
      %s432 = scalar_select %p431, %s26, 1
      %p433 = scmp.lt.s32.totalorder %s27, 3
      %s434 = scalar_select %p433, %s27, 3
      %s435 = smul.addr %s434, 2
      %s436 = smul.addr %s432, 8
      %s437 = sadd.s32 %s435, %s436
      %s438 = smul.addr %s437, 8
      %s439 = scalar_lea.vmem %s10, %s438
      %s440 = smul.u32 2, %s27
      %p441 = scmp.lt.s32.totalorder %s26, 1
      %s442 = scalar_select %p441, %s26, 1
      %p443 = scmp.lt.s32.totalorder %s440, 7
      %s444 = scalar_select %p443, %s440, 7
      %s445 = smul.addr %s442, 8
      %s446 = sadd.s32 %s444, %s445
      %s447 = smul.addr %s446, 8
      %s448 = scalar_lea.vmem %s0, %s447
      %s449 = smul.u32 2, %s27
      %p450 = scmp.lt.s32.totalorder %s26, 1
      %s451 = scalar_select %p450, %s26, 1
      %p452 = scmp.lt.s32.totalorder %s27, 3
      %s453 = scalar_select %p452, %s27, 3
      %s454 = smul.addr %s451, 4
      %s455 = sadd.s32 %s453, %s454
      %s456 = smul.addr %s455, 8
      %s457 = scalar_lea.vmem %s1, %s456
      %p458 = scmp.lt.s32.totalorder %s26, 1
      %s459 = scalar_select %p458, %s26, 1
      %p460 = scmp.lt.s32.totalorder %s27, 3
      %s461 = scalar_select %p460, %s27, 3
      %s462 = smul.addr %s459, 4
      %s463 = sadd.s32 %s461, %s462
      %s464 = smul.addr %s463, 8
      %s465 = scalar_lea.vmem %s2, %s464
      %s466 = smul.u32 2, %s27
      %p467 = scmp.lt.s32.totalorder %s26, 1
      %s468 = scalar_select %p467, %s26, 1
      %p469 = scmp.lt.s32.totalorder %s466, 7
      %s470 = scalar_select %p469, %s466, 7
      %s471 = smul.addr %s470, 2
      %s472 = smul.addr %s468, 16
      %s473 = sadd.s32 %s471, %s472
      %s474 = smul.addr %s473, 4
      %s475 = scalar_lea.vmem %s9, %s474
      %s476 = smul.u32 2, %s27
      %p477 = scmp.lt.s32.totalorder %s26, 1
      %s478 = scalar_select %p477, %s26, 1
      %p479 = scmp.lt.s32.totalorder %s27, 3
      %s480 = scalar_select %p479, %s27, 3
      %s481 = smul.addr %s480, 2
      %s482 = smul.addr %s478, 8
      %s483 = sadd.s32 %s481, %s482
      %s484 = smul.addr %s483, 8
      %s485 = scalar_lea.vmem %s10, %s484
      %v486 = vld [vmem:[%s448] sm:$0xff]
      %v487 = vld [vmem:[%s448 + $0x8] sm:$0xff]
      %v488 = vld [vmem:[%s457] sm:$0xff]
      %v489 = vld [vmem:[%s465] sm:$0xff]
      %v490 = vld [vmem:[%s3] sm:$0x7f]
      %v491 = vperm.slane %v490, 0
      %v492 = vmul.f32 %v488, %v491
      %v493 = vmul.f32 %v486, %v491
      %v494 = vmul.f32 %v487, %v491
      %v495 = vperm.slane %v490, 1
      %v496 = vmul.f32 %v488, %v495
      %v497 = vmul.f32 %v486, %v495
      %v498 = vmul.f32 %v487, %v495
      %vm502 = vcmask 1046528
      %v503 = vrot.slane %v496, 1
      %v504 = vrot.slane %v497, 1
      %v505 = vsel %vm502, %v503, %v504
      %v506 = vrot.slane %v498, 1
      %v507 = vsel %vm502, %v504, %v506
      %v511 = vadd.f32 %v492, %v505
      %v512 = vadd.f32 %v493, %v507
      %v513 = vadd.f32 %v494, %v506
      %v514 = vperm.slane %v490, 2
      %v515 = vmul.f32 %v488, %v514
      %v516 = vmul.f32 %v486, %v514
      %v517 = vmul.f32 %v487, %v514
      %vm521 = vcmask 1045504
      %v522 = vrot.slane %v515, 2
      %v523 = vrot.slane %v516, 2
      %v524 = vsel %vm521, %v522, %v523
      %v525 = vrot.slane %v517, 2
      %v526 = vsel %vm521, %v523, %v525
      %v530 = vadd.f32 %v511, %v524
      %v531 = vadd.f32 %v512, %v526
      %v532 = vadd.f32 %v513, %v525
      %v533 = vperm.slane %v490, 3
      %v534 = vmul.f32 %v486, %v533
      %v535 = vmul.f32 %v487, %v533
      %vm538 = vcmask 1044480
      %v539 = vrot.slane %v534, 3
      %v540 = vrot.slane %v535, 3
      %v541 = vsel %vm538, %v539, %v540
      %v545 = vadd.f32 %v530, %v539
      %v546 = vadd.f32 %v531, %v541
      %v547 = vadd.f32 %v532, %v540
      %v548 = vperm.slane %v490, 4
      %v549 = vmul.f32 %v486, %v548
      %v550 = vmul.f32 %v487, %v548
      %v551 = vmul.f32 %v489, %v548
      %vm555 = vcmask 1043456
      %v556 = vrot.slane %v549, 4
      %v557 = vrot.slane %v550, 4
      %v558 = vsel %vm555, %v556, %v557
      %v559 = vrot.slane %v551, 4
      %v560 = vsel %vm555, %v557, %v559
      %v564 = vadd.f32 %v545, %v556
      %v565 = vadd.f32 %v546, %v558
      %v566 = vadd.f32 %v547, %v560
      %v567 = vperm.slane %v490, 5
      %v568 = vmul.f32 %v486, %v567
      %v569 = vmul.f32 %v487, %v567
      %v570 = vmul.f32 %v489, %v567
      %vm574 = vcmask 1042432
      %v575 = vrot.slane %v568, 5
      %v576 = vrot.slane %v569, 5
      %v577 = vsel %vm574, %v575, %v576
      %v578 = vrot.slane %v570, 5
      %v579 = vsel %vm574, %v576, %v578
      %v583 = vadd.f32 %v564, %v575
      %v584 = vadd.f32 %v565, %v577
      %v585 = vadd.f32 %v566, %v579
      %v586 = vperm.slane %v490, 6
      %v587 = vmul.f32 %v486, %v586
      %v588 = vmul.f32 %v487, %v586
      %v589 = vmul.f32 %v489, %v586
      %vm593 = vcmask 1041408
      %v594 = vrot.slane %v587, 6
      %v595 = vrot.slane %v588, 6
      %v596 = vsel %vm593, %v594, %v595
      %v597 = vrot.slane %v589, 6
      %v598 = vsel %vm593, %v595, %v597
      %v602 = vadd.f32 %v583, %v594
      %v603 = vadd.f32 %v584, %v596
      %v604 = vadd.f32 %v585, %v598
      %v605 = vld [vmem:[%s4] sm:$0x1]
      %v607 = vperm.slane %v605, 0
      %v609 = vadd.f32 %v602, %v607
      %v610 = vadd.f32 %v603, %v607
      %v611 = vadd.f32 %v604, %v607
      %vm612 = vcmask 1047557
      %v613 = vsel %vm612, %v609, 0.0
      %614 = vadd.xlane.f32.xlu0 %v613
      %v615 = vpop.xlane.xlu0 %614
      %616 = vadd.xlane.f32.xlu0 %v610
      %v617 = vpop.xlane.xlu0 %616
      %v618 = vsel %vm538, %v611, 0.0
      %619 = vadd.xlane.f32.xlu0 %v618
      %v620 = vpop.xlane.xlu0 %619
      %v621 = vrcp.pop 128.0
      %v622 = vmul.f32 128.0, %v621
      %v623 = vsub.f32 1.0, %v622
      %v624 = vmul.f32 %v621, %v623
      %v625 = vadd.f32 %v621, %v624
      %vm626 = vweird.f32 %v621
      %v627 = vsel %vm626, %v621, %v625
      %v628 = vmul.f32 %v615, %v627
      %v629 = vmul.f32 %v617, %v627
      %v630 = vmul.f32 %v620, %v627
      %v631 = vsub.f32 %v609, %v628
      %v632 = vsub.f32 %v610, %v629
      %v633 = vsub.f32 %v611, %v630
      %v634 = vmul.f32 %v631, %v631
      %v635 = vmul.f32 %v632, %v632
      %v636 = vmul.f32 %v633, %v633
      %v637 = vsel %vm612, %v634, 0.0
      %638 = vadd.xlane.f32.xlu0 %v637
      %v639 = vpop.xlane.xlu0 %638
      %640 = vadd.xlane.f32.xlu0 %v635
      %v641 = vpop.xlane.xlu0 %640
      %v642 = vsel %vm538, %v636, 0.0
      %643 = vadd.xlane.f32.xlu0 %v642
      %v644 = vpop.xlane.xlu0 %643
      %v645 = vmul.f32 %v639, %v627
      %v646 = vmul.f32 %v641, %v627
      %v647 = vmul.f32 %v644, %v627
      %v648 = vadd.f32 %v645, 1e-05
      %v649 = vadd.f32 %v646, 1e-05
      %v650 = vadd.f32 %v647, 1e-05
      %v651 = vrsqrt.pop %v648
      %v652 = vmul.f32 %v651, %v648
      %v653 = vmul.f32 %v652, %v651
      %v654 = vmul.f32 0.5, %v653
      %v655 = vsub.f32 1.5, %v654
      %v656 = vmul.f32 %v651, %v655
      %vm657 = vweird.f32 %v648
      %vm658 = vweird.f32 %v651
      %vm659 = vmor %vm657, %vm658
      %v660 = vsel %vm659, %v651, %v656
      %v661 = vrsqrt.pop %v649
      %v662 = vmul.f32 %v661, %v649
      %v663 = vmul.f32 %v662, %v661
      %v664 = vmul.f32 0.5, %v663
      %v665 = vsub.f32 1.5, %v664
      %v666 = vmul.f32 %v661, %v665
      %vm667 = vweird.f32 %v649
      %vm668 = vweird.f32 %v661
      %vm669 = vmor %vm667, %vm668
      %v670 = vsel %vm669, %v661, %v666
      %v671 = vrsqrt.pop %v650
      %v672 = vmul.f32 %v671, %v650
      %v673 = vmul.f32 %v672, %v671
      %v674 = vmul.f32 0.5, %v673
      %v675 = vsub.f32 1.5, %v674
      %v676 = vmul.f32 %v671, %v675
      %vm677 = vweird.f32 %v650
      %vm678 = vweird.f32 %v671
      %vm679 = vmor %vm677, %vm678
      %v680 = vsel %vm679, %v671, %v676
      %v681 = vmul.f32 %v631, %v660
      %v682 = vmul.f32 %v632, %v670
      %v683 = vmul.f32 %v633, %v680
      %v684 = vld [vmem:[%s5] sm:$0x1]
      %v686 = vperm.slane %v684, 0
      %v688 = vmul.f32 %v681, %v686
      %v689 = vmul.f32 %v682, %v686
      %v690 = vmul.f32 %v683, %v686
      %v691 = vld [vmem:[%s6] sm:$0x1]
      %v693 = vperm.slane %v691, 0
      %v695 = vadd.f32 %v688, %v693
      %v696 = vadd.f32 %v689, %v693
      %v697 = vadd.f32 %v690, %v693
      %v698 = vpack.c.bf16 %v696, %v695
      %v699 = vpack.c.bf16 %v697, %v697
      %v700 = vld [vmem:[%s7] sm:$0xff]
      %v701 = vld [vmem:[%s7 + $0x8] sm:$0xff]
      %v702 = vld [vmem:[%s7 + $0x10] sm:$0xff]
      %v703 = vld [vmem:[%s7 + $0x18] sm:$0xff]
      %v704 = vld [vmem:[%s7 + $0x20] sm:$0xff]
      %v705 = vld [vmem:[%s7 + $0x28] sm:$0xff]
      %v706 = vld [vmem:[%s7 + $0x30] sm:$0xff]
      %v707 = vld [vmem:[%s7 + $0x38] sm:$0xff]
      %v708 = vld [vmem:[%s7 + $0x40] sm:$0xff]
      %v709 = vld [vmem:[%s7 + $0x48] sm:$0xff]
      %v710 = vld [vmem:[%s7 + $0x50] sm:$0xff]
      %v711 = vld [vmem:[%s7 + $0x58] sm:$0xff]
      %v712 = vld [vmem:[%s7 + $0x60] sm:$0xff]
      %v713 = vld [vmem:[%s7 + $0x68] sm:$0xff]
      %v714 = vld [vmem:[%s7 + $0x70] sm:$0xff]
      %v715 = vld [vmem:[%s7 + $0x78] sm:$0xff]
      %v716 = vld [vmem:[%s8] sm:$0x3]
      %v718 = vperm.slane %v716, 0
      %v719 = vperm.slane %v716, 1
      %vm722 = vsmask.f32 5376
      %v724 = vshrl.u32 %v698, 16
      %v726 = vrot.slane %v724, 2
      %v727 = vshll.u32 %v698, 16
      %v729 = vrot.slane %v727, 3
      %v730 = vor.u32 %v726, %v729
      %v732 = vshrl.u32 %v699, 16
      %v734 = vrot.slane %v732, 2
      %v735 = vshll.u32 %v699, 16
      %v737 = vrot.slane %v735, 3
      %v738 = vor.u32 %v734, %v737
      %v739 = vsel %vm722, %v730, %v738
      %v757 = vunpack.c.l.b16 %v700
      %v758 = vunpack.c.h.b16 %v700
      %v759 = vunpack.c.l.b16 %v701
      %v760 = vunpack.c.h.b16 %v701
      %v761 = vunpack.c.l.b16 %v702
      %v762 = vunpack.c.h.b16 %v702
      %v763 = vunpack.c.l.b16 %v703
      %v764 = vunpack.c.h.b16 %v703
      %v765 = vunpack.c.l.b16 %v704
      %v766 = vunpack.c.h.b16 %v704
      %v767 = vunpack.c.l.b16 %v705
      %v768 = vunpack.c.h.b16 %v705
      %v769 = vunpack.c.l.b16 %v706
      %v770 = vunpack.c.h.b16 %v706
      %v771 = vunpack.c.l.b16 %v707
      %v772 = vunpack.c.h.b16 %v707
      %v773 = vunpack.c.l.b16 %v708
      %v774 = vunpack.c.h.b16 %v708
      %v775 = vunpack.c.l.b16 %v709
      %v776 = vunpack.c.h.b16 %v709
      %v777 = vunpack.c.l.b16 %v710
      %v778 = vunpack.c.h.b16 %v710
      %v779 = vunpack.c.l.b16 %v711
      %v780 = vunpack.c.h.b16 %v711
      %v781 = vunpack.c.l.b16 %v712
      %v782 = vunpack.c.h.b16 %v712
      %v783 = vunpack.c.l.b16 %v713
      %v784 = vunpack.c.h.b16 %v713
      %v785 = vunpack.c.l.b16 %v714
      %v786 = vunpack.c.h.b16 %v714
      %v787 = vunpack.c.l.b16 %v715
      %v788 = vunpack.c.h.b16 %v715
      %v789 = vpack.c.b16 %v759, %v757
      %v790 = vpack.c.b16 %v760, %v758
      %v791 = vpack.c.b16 %v763, %v761
      %v792 = vpack.c.b16 %v764, %v762
      %v793 = vpack.c.b16 %v767, %v765
      %v794 = vpack.c.b16 %v768, %v766
      %v795 = vpack.c.b16 %v771, %v769
      %v796 = vpack.c.b16 %v772, %v770
      %v797 = vpack.c.b16 %v775, %v773
      %v798 = vpack.c.b16 %v776, %v774
      %v799 = vpack.c.b16 %v779, %v777
      %v800 = vpack.c.b16 %v780, %v778
      %v801 = vpack.c.b16 %v783, %v781
      %v802 = vpack.c.b16 %v784, %v782
      %v803 = vpack.c.b16 %v787, %v785
      %v804 = vpack.c.b16 %v788, %v786
      %821 = vmatpush.bf16.msra.mxu0 %v803
      %822 = vmatpush.bf16.msra.mxu0 %v801
      %823 = vmatpush.bf16.msra.mxu0 %v799
      %824 = vmatpush.bf16.msra.mxu0 %v797
      %825 = vmatpush.bf16.msra.mxu0 %v795
      %826 = vmatpush.bf16.msra.mxu0 %v793
      %827 = vmatpush.bf16.msra.mxu0 %v791
      %828 = vmatpush.bf16.msra.mxu0 %v789
      %829 = vmatmul.bf16.gmra.mxu0 %v739
      %v830 = vpop.f32.mrf.mxu0
      %v831 = vadd.f32 %v718, %v830
      %v832 = vpop.f32.mrf.mxu0
      %v833 = vadd.f32 %v718, %v832
      %834 = vdwg.mxu0
      %835 = vmatpush.bf16.msra.mxu0 %v804
      %836 = vmatpush.bf16.msra.mxu0 %v802
      %837 = vmatpush.bf16.msra.mxu0 %v800
      %838 = vmatpush.bf16.msra.mxu0 %v798
      %839 = vmatpush.bf16.msra.mxu0 %v796
      %840 = vmatpush.bf16.msra.mxu0 %v794
      %841 = vmatpush.bf16.msra.mxu0 %v792
      %842 = vmatpush.bf16.msra.mxu0 %v790
      %843 = vmatmul.bf16.gmra.mxu0 %v739
      %v844 = vpop.f32.mrf.mxu0
      %v845 = vadd.f32 %v719, %v844
      %v846 = vpop.f32.mrf.mxu0
      %v847 = vadd.f32 %v719, %v846
      %848 = vdwg.mxu0
      %v849 = vmul.f32 %v831, 0.5
      %v850 = vmul.f32 %v845, 0.5
      %v851 = vmul.f32 %v833, 0.5
      %v852 = vmul.f32 %v847, 0.5
      %v853 = vmul.f32 %v831, 0.70710677
      %v854 = vmul.f32 %v845, 0.70710677
      %v855 = vmul.f32 %v833, 0.70710677
      %v856 = vmul.f32 %v847, 0.70710677
      %v857 = vmul.f32 %v853, %v853
      %v858 = vmin.f32 16.0, %v857
      %v859 = vmul.f32 %v858, 2.1237322e-06
      %v860 = vadd.f32 %v859, 0.00028619796
      %v861 = vmul.f32 %v858, %v860
      %v862 = vadd.f32 %v861, 0.0036580483
      %v863 = vmul.f32 %v858, %v862
      %v864 = vadd.f32 %v863, 0.05243302
      %v865 = vmul.f32 %v858, %v864
      %v866 = vadd.f32 %v865, 0.18741608
      %v867 = vmul.f32 %v858, %v866
      %v868 = vadd.f32 %v867, 1.1283791
      %v869 = vmul.f32 %v853, %v868
      %v870 = vmul.f32 %v858, 3.8918573e-05
      %v871 = vadd.f32 %v870, 0.001143296
      %v872 = vmul.f32 %v858, %v871
      %v873 = vadd.f32 %v872, 0.014752088
      %v874 = vmul.f32 %v858, %v873
      %v875 = vadd.f32 %v874, 0.112945676
      %v876 = vmul.f32 %v858, %v875
      %v877 = vadd.f32 %v876, 0.4994258
      %v878 = vmul.f32 %v858, %v877
      %v879 = vadd.f32 %v878, 1.0
      %v880 = vrcp.pop %v879
      %v881 = vmul.f32 %v879, %v880
      %v882 = vsub.f32 1.0, %v881
      %v883 = vmul.f32 %v880, %v882
      %v884 = vadd.f32 %v880, %v883
      %vm885 = vweird.f32 %v879
      %vm886 = vweird.f32 %v880
      %vm887 = vmor %vm885, %vm886
      %v888 = vsel %vm887, %v880, %v884
      %v889 = vand.u32 2147483647, %v879
      %vm890 = vcmp.eq.f32.partialorder %v889, 8.507059e+37
      %v891 = vand.u32 %v879, 2147483648
      %v892 = vor.u32 1.1754944e-38, %v891
      %v893 = vsel %vm890, %v892, %v888
      %v894 = vmul.f32 %v869, %v893
      %v895 = vmin.f32 %v894, 1.0
      %v896 = vmax.f32 %v895, -1.0
      %v897 = vmul.f32 %v854, %v854
      %v898 = vmin.f32 16.0, %v897
      %v899 = vmul.f32 %v898, 2.1237322e-06
      %v900 = vadd.f32 %v899, 0.00028619796
      %v901 = vmul.f32 %v898, %v900
      %v902 = vadd.f32 %v901, 0.0036580483
      %v903 = vmul.f32 %v898, %v902
      %v904 = vadd.f32 %v903, 0.05243302
      %v905 = vmul.f32 %v898, %v904
      %v906 = vadd.f32 %v905, 0.18741608
      %v907 = vmul.f32 %v898, %v906
      %v908 = vadd.f32 %v907, 1.1283791
      %v909 = vmul.f32 %v854, %v908
      %v910 = vmul.f32 %v898, 3.8918573e-05
      %v911 = vadd.f32 %v910, 0.001143296
      %v912 = vmul.f32 %v898, %v911
      %v913 = vadd.f32 %v912, 0.014752088
      %v914 = vmul.f32 %v898, %v913
      %v915 = vadd.f32 %v914, 0.112945676
      %v916 = vmul.f32 %v898, %v915
      %v917 = vadd.f32 %v916, 0.4994258
      %v918 = vmul.f32 %v898, %v917
      %v919 = vadd.f32 %v918, 1.0
      %v920 = vrcp.pop %v919
      %v921 = vmul.f32 %v919, %v920
      %v922 = vsub.f32 1.0, %v921
      %v923 = vmul.f32 %v920, %v922
      %v924 = vadd.f32 %v920, %v923
      %vm925 = vweird.f32 %v919
      %vm926 = vweird.f32 %v920
      %vm927 = vmor %vm925, %vm926
      %v928 = vsel %vm927, %v920, %v924
      %v929 = vand.u32 2147483647, %v919
      %vm930 = vcmp.eq.f32.partialorder %v929, 8.507059e+37
      %v931 = vand.u32 %v919, 2147483648
      %v932 = vor.u32 1.1754944e-38, %v931
      %v933 = vsel %vm930, %v932, %v928
      %v934 = vmul.f32 %v909, %v933
      %v935 = vmin.f32 %v934, 1.0
      %v936 = vmax.f32 %v935, -1.0
      %v937 = vmul.f32 %v855, %v855
      %v938 = vmin.f32 16.0, %v937
      %v939 = vmul.f32 %v938, 2.1237322e-06
      %v940 = vadd.f32 %v939, 0.00028619796
      %v941 = vmul.f32 %v938, %v940
      %v942 = vadd.f32 %v941, 0.0036580483
      %v943 = vmul.f32 %v938, %v942
      %v944 = vadd.f32 %v943, 0.05243302
      %v945 = vmul.f32 %v938, %v944
      %v946 = vadd.f32 %v945, 0.18741608
      %v947 = vmul.f32 %v938, %v946
      %v948 = vadd.f32 %v947, 1.1283791
      %v949 = vmul.f32 %v855, %v948
      %v950 = vmul.f32 %v938, 3.8918573e-05
      %v951 = vadd.f32 %v950, 0.001143296
      %v952 = vmul.f32 %v938, %v951
      %v953 = vadd.f32 %v952, 0.014752088
      %v954 = vmul.f32 %v938, %v953
      %v955 = vadd.f32 %v954, 0.112945676
      %v956 = vmul.f32 %v938, %v955
      %v957 = vadd.f32 %v956, 0.4994258
      %v958 = vmul.f32 %v938, %v957
      %v959 = vadd.f32 %v958, 1.0
      %v960 = vrcp.pop %v959
      %v961 = vmul.f32 %v959, %v960
      %v962 = vsub.f32 1.0, %v961
      %v963 = vmul.f32 %v960, %v962
      %v964 = vadd.f32 %v960, %v963
      %vm965 = vweird.f32 %v959
      %vm966 = vweird.f32 %v960
      %vm967 = vmor %vm965, %vm966
      %v968 = vsel %vm967, %v960, %v964
      %v969 = vand.u32 2147483647, %v959
      %vm970 = vcmp.eq.f32.partialorder %v969, 8.507059e+37
      %v971 = vand.u32 %v959, 2147483648
      %v972 = vor.u32 1.1754944e-38, %v971
      %v973 = vsel %vm970, %v972, %v968
      %v974 = vmul.f32 %v949, %v973
      %v975 = vmin.f32 %v974, 1.0
      %v976 = vmax.f32 %v975, -1.0
      %v977 = vmul.f32 %v856, %v856
      %v978 = vmin.f32 16.0, %v977
      %v979 = vmul.f32 %v978, 2.1237322e-06
      %v980 = vadd.f32 %v979, 0.00028619796
      %v981 = vmul.f32 %v978, %v980
      %v982 = vadd.f32 %v981, 0.0036580483
      %v983 = vmul.f32 %v978, %v982
      %v984 = vadd.f32 %v983, 0.05243302
      %v985 = vmul.f32 %v978, %v984
      %v986 = vadd.f32 %v985, 0.18741608
      %v987 = vmul.f32 %v978, %v986
      %v988 = vadd.f32 %v987, 1.1283791
      %v989 = vmul.f32 %v856, %v988
      %v990 = vmul.f32 %v978, 3.8918573e-05
      %v991 = vadd.f32 %v990, 0.001143296
      %v992 = vmul.f32 %v978, %v991
      %v993 = vadd.f32 %v992, 0.014752088
      %v994 = vmul.f32 %v978, %v993
      %v995 = vadd.f32 %v994, 0.112945676
      %v996 = vmul.f32 %v978, %v995
      %v997 = vadd.f32 %v996, 0.4994258
      %v998 = vmul.f32 %v978, %v997
      %v999 = vadd.f32 %v998, 1.0
      %v1000 = vrcp.pop %v999
      %v1001 = vmul.f32 %v999, %v1000
      %v1002 = vsub.f32 1.0, %v1001
      %v1003 = vmul.f32 %v1000, %v1002
      %v1004 = vadd.f32 %v1000, %v1003
      %vm1005 = vweird.f32 %v999
      %vm1006 = vweird.f32 %v1000
      %vm1007 = vmor %vm1005, %vm1006
      %v1008 = vsel %vm1007, %v1000, %v1004
      %v1009 = vand.u32 2147483647, %v999
      %vm1010 = vcmp.eq.f32.partialorder %v1009, 8.507059e+37
      %v1011 = vand.u32 %v999, 2147483648
      %v1012 = vor.u32 1.1754944e-38, %v1011
      %v1013 = vsel %vm1010, %v1012, %v1008
      %v1014 = vmul.f32 %v989, %v1013
      %v1015 = vmin.f32 %v1014, 1.0
      %v1016 = vmax.f32 %v1015, -1.0
      %v1017 = vadd.f32 %v896, 1.0
      %v1018 = vadd.f32 %v936, 1.0
      %v1019 = vadd.f32 %v976, 1.0
      %v1020 = vadd.f32 %v1016, 1.0
      %v1021 = vmul.f32 %v849, %v1017
      %v1022 = vmul.f32 %v850, %v1018
      %v1023 = vmul.f32 %v851, %v1019
      %v1024 = vmul.f32 %v852, %v1020
      %v1025 = vmul.f32 %v1021, %v1021
      %v1026 = vmul.f32 %v1022, %v1022
      %v1027 = vmul.f32 %v1023, %v1023
      %v1028 = vmul.f32 %v1024, %v1024
      %v1029 = vadd.f32 %v1025, %v1027
      %v1030 = vrot.slane %v1029, 4
      %v1031 = vadd.f32 %v1029, %v1030
      %v1032 = vrot.slane %v1031, 2
      %v1033 = vadd.f32 %v1031, %v1032
      %v1034 = vrot.slane %v1033, 1
      %v1035 = vadd.f32 %v1033, %v1034
      %v1036 = vadd.f32 %v1026, %v1028
      %v1037 = vrot.slane %v1036, 4
      %v1038 = vadd.f32 %v1036, %v1037
      %v1039 = vrot.slane %v1038, 2
      %v1040 = vadd.f32 %v1038, %v1039
      %v1041 = vrot.slane %v1040, 1
      %v1042 = vadd.f32 %v1040, %v1041
      %1043 = vst [vmem:[%s485] sm:$0xff] %v1035
      %1044 = vst [vmem:[%s485 + $0x8] sm:$0xff] %v1042
      %v1045 = vpack.c.bf16 %v1022, %v1021
      %v1046 = vpack.c.bf16 %v1024, %v1023
      %1047 = vst [vmem:[%s475] sm:$0xff] %v1045
      %1048 = vst [vmem:[%s475 + $0x8] sm:$0xff] %v1046
      %s1049 = smul.u32 2, %s27
      %p1050 = scmp.lt.s32.totalorder %s26, 1
      %s1051 = scalar_select %p1050, %s26, 1
      %p1052 = scmp.lt.s32.totalorder %s1049, 7
      %s1053 = scalar_select %p1052, %s1049, 7
      %s1054 = smul.addr %s1053, 2
      %s1055 = smul.addr %s1051, 16
      %s1056 = sadd.s32 %s1054, %s1055
      %s1057 = smul.addr %s1056, 4
      %s1058 = scalar_lea.vmem %s9, %s1057
      %p1059 = scmp.lt.s32.totalorder %s26, 1
      %s1060 = scalar_select %p1059, %s26, 1
      %p1061 = scmp.lt.s32.totalorder %s27, 3
      %s1062 = scalar_select %p1061, %s27, 3
      %s1063 = smul.addr %s1062, 2
      %s1064 = smul.addr %s1060, 8
      %s1065 = sadd.s32 %s1063, %s1064
      %s1066 = smul.addr %s1065, 8
      %s1067 = scalar_lea.vmem %s10, %s1066
      // Predicated region
      $region57: #{convnext_layer.2} parent=55 // pred_check
        %p1068 = pneg %p264
      $region58: #{convnext_layer.2} parent=55 // pred_check_branch
        %1070 = sbr.rel (%p1068) target = $region60
      $region59: #{convnext_layer.2} parent=55 // pred_region
        %s1071 = smul.u32 2, %s27
      $region60: #{convnext_layer.2} parent=55 // pred_fallthru
        _
      // Predicated region
      $region61: #{convnext_layer.2} parent=55 // pred_check
        %p1072 = pneg %p292
      $region62: #{convnext_layer.2} parent=55 // pred_check_branch
        %1074 = sbr.rel (%p1072) target = $region64
      $region63: #{convnext_layer.2} parent=55 // pred_region
        _
      $region64: #{convnext_layer.2} parent=55 // pred_fallthru
        _
    $region56: #{convnext_layer.2} parent=5 // pred_fallthru
      _
    %p1075 = scmp.le.s32.totalorder 2, %s17
    // Predicated region
    $region65: #{convnext_layer.2} parent=5 // pred_check
      %p1076 = pneg %p1075
    $region66: #{convnext_layer.2} parent=5 // pred_check_branch
      %1078 = sbr.rel (%p1076) target = $region68
    $region67: #{convnext_layer.2} parent=5 // pred_region
      %s1079 = ssub.s32 %s17, 2
      // Predicated region
      $region69: #{convnext_layer.2} parent=67 // pred_check
        %p1080 = pneg %p270
      $region70: #{convnext_layer.2} parent=67 // pred_check_branch
        %1082 = sbr.rel (%p1080) target = $region72
      $region71: #{convnext_layer.2} parent=67 // pred_region
        %s1083 = smul.u32 2, %s29
        %p1084 = scmp.lt.s32.totalorder %s28, 1
        %s1085 = scalar_select %p1084, %s28, 1
        %p1086 = scmp.lt.s32.totalorder %s1083, 7
        %s1087 = scalar_select %p1086, %s1083, 7
        %s1088 = smul.addr %s1087, 2
        %s1089 = smul.addr %s1085, 16
        %s1090 = sadd.s32 %s1088, %s1089
        %s1091 = smul.addr %s1090, 4
        %s1092 = scalar_lea.vmem %s9, %s1091
      $region72: #{convnext_layer.2} parent=67 // pred_fallthru
        _
      // Predicated region
      $region73: #{convnext_layer.2} parent=67 // pred_check
        %p1093 = pneg %p298
      $region74: #{convnext_layer.2} parent=67 // pred_check_branch
        %1095 = sbr.rel (%p1093) target = $region76
      $region75: #{convnext_layer.2} parent=67 // pred_region
        %p1096 = scmp.lt.s32.totalorder %s28, 1
        %s1097 = scalar_select %p1096, %s28, 1
        %p1098 = scmp.lt.s32.totalorder %s29, 3
        %s1099 = scalar_select %p1098, %s29, 3
        %s1100 = smul.addr %s1099, 2
        %s1101 = smul.addr %s1097, 8
        %s1102 = sadd.s32 %s1100, %s1101
        %s1103 = smul.addr %s1102, 8
        %s1104 = scalar_lea.vmem %s10, %s1103
      $region76: #{convnext_layer.2} parent=67 // pred_fallthru
        _
    $region68: #{convnext_layer.2} parent=5 // pred_fallthru
      _
  $region6: #{convnext_layer.2} parent=0 // loop_footer
    %s21 = sadd.s32 1, %s17
  $region7: #{convnext_layer.2} parent=0 // loop_footer_branch
    %16 = sbr.rel target = $region3
  $region8: #{convnext_layer.2} parent=0 // loop_exit
    _

</llo_original>
